<compile_context>
chip_gen: v6e
topology: v6e:2x2x1
jax: 0.10.0
libtpu: 0.0.40
codegen_flags: <defaults>
</compile_context>

<pallas_src>
import functools

import jax
import jax.numpy as jnp
from jax import lax
from jax.experimental import pallas as pl
from jax.experimental.pallas import tpu as pltpu


# ----------------------------------------------------------------------------
# Fused kernel: one grid step == one ConvGRUCell update of one layer.
# ----------------------------------------------------------------------------
def convgru_fused_kernel(fidx_ref,      # SMEM (total_steps,) int32 frame table (used by index_maps)
                         x_ref,         # (1, KX, HW)   im2col'd frame (+ ones row for bias folding)
                         wx_ref,        # (1, 3*Ch, KX) [update; reset; out] x-side weights (+ bias col)
                         wh_ref,        # (1, 2*Ch, KH) [update; reset] h-side weights
                         wo_ref,        # (1,   Ch, KH) out-gate h-side weights
                         out_ref,       # (1, 1, Ch, HW) new hidden for this (layer, step)
                         h_pad_ref,     # VMEM scratch (Ch, PADLEN): persistent zero-haloed hidden
                         hr_pad_ref,    # VMEM scratch (Ch, PADLEN): zero-haloed (h * reset)
                         *, H, W, k, Ch):
    del fidx_ref  # only consumed by the index_maps
    HW = H * W
    p = k // 2
    OFF = p * W + p                      # flat position of element (0, 0) inside the halo'd layout
    step = pl.program_id(1)

    # Zero hidden state + halos once per layer. The hidden persists across
    # chunks; halos stay zero because later writes only touch the interior.
    @pl.when(step == 0)
    def _init():
        h_pad_ref[...] = jnp.zeros_like(h_pad_ref)
        hr_pad_ref[...] = jnp.zeros_like(hr_pad_ref)

    # Column-boundary masks (vertical boundaries are handled by the zero halo).
    xcoord = lax.broadcasted_iota(jnp.int32, (1, HW), 1) % W
    col_mask = {ox: (xcoord + ox >= 0) & (xcoord + ox < W)
                for ox in range(-p, p + 1) if ox != 0}

    def im2col_taps(src_ref):
        """Build the (k*k*Ch, HW) patch matrix from a zero-haloed flat ref."""
        slabs = []
        for dy in range(k):
            for dx in range(k):
                oy, ox = dy - p, dx - p
                start = OFF + oy * W + ox
                slab = src_ref[:, start:start + HW]           # (Ch, HW) static lane slice
                if ox != 0:
                    slab = jnp.where(col_mask[ox], slab, 0.0)
                slabs.append(slab)
        return jnp.concatenate(slabs, axis=0)                 # (k*k*Ch, HW)

    # x-side pre-activations for all three gates (biases folded via ones row).
    gx = jnp.dot(wx_ref[0], x_ref[0], preferred_element_type=jnp.float32)    # (3Ch, HW)

    # h-side pre-activations for update & reset (single K=k*k*Ch matmul).
    ph = im2col_taps(h_pad_ref)                                              # (k*k*Ch, HW)
    gh = jnp.dot(wh_ref[0], ph, preferred_element_type=jnp.float32)          # (2Ch, HW)

    update = jax.nn.sigmoid(gx[0:Ch] + gh[0:Ch])
    reset = jax.nn.sigmoid(gx[Ch:2 * Ch] + gh[Ch:2 * Ch])

    # Out gate: conv over [x, h*reset]; write (h*reset) into the haloed scratch
    # interior and reuse the same tap machinery.
    h_cur = h_pad_ref[:, OFF:OFF + HW]                                       # (Ch, HW)
    hr_pad_ref[:, OFF:OFF + HW] = h_cur * reset
    phr = im2col_taps(hr_pad_ref)
    oh = jnp.dot(wo_ref[0], phr, preferred_element_type=jnp.float32)         # (Ch, HW)
    out_inputs = jnp.tanh(gx[2 * Ch:3 * Ch] + oh)        # default out_gate_activation = tanh

    # invert_update_gate = False (default).
    h_new = h_cur * (1.0 - update) + out_inputs * update
    h_pad_ref[:, OFF:OFF + HW] = h_new
    out_ref[0, 0] = h_new


# ----------------------------------------------------------------------------
# Host-side packing: im2col of input frames, gate-weight concatenation.
# ----------------------------------------------------------------------------
def _im2col_frames(x_nchw, k):
    """(T, Cx, H, W) -> (T, k*k*Cx + 1, H*W); last row is ones (bias folding)."""
    T, Cx, H, W = x_nchw.shape
    p = k // 2
    x_hwc = jnp.transpose(x_nchw, (0, 2, 3, 1)).astype(jnp.float32)
    x_pad = jnp.pad(x_hwc, ((0, 0), (p, p), (p, p), (0, 0)))
    cols = [x_pad[:, dy:dy + H, dx:dx + W, :].reshape(T, H * W, Cx)
            for dy in range(k) for dx in range(k)]
    patches = jnp.concatenate(cols, axis=-1)              # (T, HW, k*k*Cx), K = tap*Cx + cin
    patches = jnp.transpose(patches, (0, 2, 1))           # (T, k*k*Cx, HW)
    ones = jnp.ones((T, 1, H * W), jnp.float32)
    return jnp.concatenate([patches, ones], axis=1)       # (T, k*k*Cx + 1, HW)


def _pack_params(params_list, Cx, Ch, k):
    """Per layer: Wx (3Ch, k*k*Cx+1 incl. bias col), Wh_ur (2Ch, k*k*Ch), Wo_h (Ch, k*k*Ch)."""
    def xmat(w):   # (k,k,Cx,Ch) -> (Ch, k*k*Cx), K = tap*Cx + cin
        return w.reshape(k * k * Cx, Ch).T

    def hmat(w):   # (k,k,Ch,Ch) -> (Ch, k*k*Ch), K = tap*Ch + cin
        return w.reshape(k * k * Ch, Ch).T

    wx_l, wh_l, wo_l = [], [], []
    for prm in params_list:
        wx = jnp.concatenate([xmat(prm["wu_x"]), xmat(prm["wr_x"]), xmat(prm["wo_x"])], axis=0)
        bias = jnp.concatenate([prm["bu"], prm["br"], prm["bo"]]).reshape(-1, 1)
        wx_l.append(jnp.concatenate([wx, bias], axis=1).astype(jnp.float32))
        wh_l.append(jnp.concatenate([hmat(prm["wu_h"]), hmat(prm["wr_h"])], axis=0).astype(jnp.float32))
        wo_l.append(hmat(prm["wo_h"]).astype(jnp.float32))
    return jnp.stack(wx_l), jnp.stack(wh_l), jnp.stack(wo_l)


# ----------------------------------------------------------------------------
# Fused ConvGRU forward (mirrors the PyTorch ConvGRU.forward control flow).
# ----------------------------------------------------------------------------
@functools.partial(jax.jit, static_argnames=("sequence_length",))
def convgru_forward_pallas(params_list, x_nchw, *, sequence_length):
    """x_nchw: (T, Cx, H, W) -> (num_chunks*sl, Ch, H, W) == torch.cat(upd_hidden, 0)."""
    T, Cx, H, W = x_nchw.shape
    sl = sequence_length
    n_layers = len(params_list)
    k = params_list[0]["wu_x"].shape[0]
    Ch = params_list[0]["wu_x"].shape[-1]
    p = k // 2
    HW = H * W
    KX = k * k * Cx + 1
    KH = k * k * Ch
    PADLEN = HW + 2 * p * W + 2 * p
    num_chunks = T // sl
    total_steps = num_chunks * (sl + 1)

    # Frame schedule per chunk: warm-up step on frame t0, then frames t0..t0+sl-1.
    fidx = []
    for c in range(num_chunks):
        fidx.append(c * sl)
        fidx.extend(range(c * sl, c * sl + sl))
    frame_idx = jnp.asarray(fidx, dtype=jnp.int32)

    x_cols = _im2col_frames(x_nchw, k)                      # (T, KX, HW)
    wx_all, wh_all, wo_all = _pack_params(params_list, Cx, Ch, k)

    kern = functools.partial(convgru_fused_kernel, H=H, W=W, k=k, Ch=Ch)
    grid_spec = pltpu.PrefetchScalarGridSpec(
        num_scalar_prefetch=1,
        grid=(n_layers, total_steps),
        in_specs=[
            pl.BlockSpec((1, KX, HW), lambda l, s, fi: (fi[s], 0, 0)),       # streamed frame
            pl.BlockSpec((1, 3 * Ch, KX), lambda l, s, fi: (l, 0, 0)),       # per-layer weights
            pl.BlockSpec((1, 2 * Ch, KH), lambda l, s, fi: (l, 0, 0)),
            pl.BlockSpec((1, Ch, KH), lambda l, s, fi: (l, 0, 0)),
        ],
        out_specs=pl.BlockSpec((1, 1, Ch, HW), lambda l, s, fi: (l, s, 0, 0)),
        scratch_shapes=[pltpu.VMEM((Ch, PADLEN), jnp.float32),   # persistent hidden (haloed)
                        pltpu.VMEM((Ch, PADLEN), jnp.float32)],  # haloed (h * reset)
    )
    hiddens = pl.pallas_call(
        kern,
        out_shape=jax.ShapeDtypeStruct((n_layers, total_steps, Ch, HW), jnp.float32),
        grid_spec=grid_spec,
        compiler_params=pltpu.CompilerParams(
            dimension_semantics=("parallel", "arbitrary")),
    )(frame_idx, x_cols, wx_all, wh_all, wo_all)

    # The module appends only the LAST layer's hidden after each of the `sl`
    # inner time steps (the warm-up step is not appended).
    last = hiddens[-1].reshape(num_chunks, sl + 1, Ch, H, W)[:, 1:]
    return last.reshape(num_chunks * sl, Ch, H, W)


# ----------------------------------------------------------------------------
# Pure-JAX reference (lax.conv) following the same module control flow.
# ----------------------------------------------------------------------------
def _ref_conv(x_hwc, w_kkio):
    y = lax.conv_general_dilated(
        x_hwc[None], w_kkio, window_strides=(1, 1), padding="SAME",
        dimension_numbers=("NHWC", "HWIO", "NHWC"),
        precision=lax.Precision.HIGHEST)
    return y[0]


def ref_cell_step(params, x_hwc, h_hwc):
    bu = params["bu"].reshape(1, 1, -1)
    br = params["br"].reshape(1, 1, -1)
    bo = params["bo"].reshape(1, 1, -1)
    update = jax.nn.sigmoid(_ref_conv(x_hwc, params["wu_x"])
                            + _ref_conv(h_hwc, params["wu_h"]) + bu)
    reset = jax.nn.sigmoid(_ref_conv(x_hwc, params["wr_x"])
                           + _ref_conv(h_hwc, params["wr_h"]) + br)
    out_inputs = jnp.tanh(_ref_conv(x_hwc, params["wo_x"])
                          + _ref_conv(h_hwc * reset, params["wo_h"]) + bo)
    return h_hwc * (1.0 - update) + out_inputs * update


def convgru_forward_ref(params_list, x_nchw, sequence_length):
    T, _, H, W = x_nchw.shape
    sl = sequence_length
    Ch = params_list[0]["wu_x"].shape[-1]
    x_hwc = jnp.transpose(x_nchw, (0, 2, 3, 1)).astype(jnp.float32)
    hiddens = [jnp.zeros((H, W, Ch), jnp.float32) for _ in params_list]
    outputs = []
    for c in range(T // sl):
        t0 = c * sl
        for i in range(len(params_list)):          # warm-up step
            hiddens[i] = ref_cell_step(params_list[i], x_hwc[t0], hiddens[i])
        for s in range(sl):                        # time loop
            xt = x_hwc[t0 + s]
            for i in range(len(params_list)):
                hiddens[i] = ref_cell_step(params_list[i], xt, hiddens[i])
            outputs.append(hiddens[-1])
    out = jnp.stack(outputs, axis=0)               # (num_chunks*sl, H, W, Ch)
    return jnp.transpose(out, (0, 3, 1, 2))


# ----------------------------------------------------------------------------
# Deterministic parameter init (Conv2d(input_size + hs, hs, k) shapes, HWIO).
# ----------------------------------------------------------------------------
def init_cell_params(key, Cx, Ch, k):
    keys = jax.random.split(key, 6)
    fan_in = (Cx + Ch) * k * k
    bound = 1.0 / (fan_in ** 0.5)

    def w(kk):
        return jax.random.uniform(kk, (k, k, Cx + Ch, Ch), jnp.float32, -bound, bound)

    def b(kk):
        return jax.random.uniform(kk, (Ch,), jnp.float32, -bound, bound)

    Wu, Wr, Wo = w(keys[0]), w(keys[1]), w(keys[2])
    return dict(
        wu_x=Wu[:, :, :Cx, :], wu_h=Wu[:, :, Cx:, :],
        wr_x=Wr[:, :, :Cx, :], wr_h=Wr[:, :, Cx:, :],
        wo_x=Wo[:, :, :Cx, :], wo_h=Wo[:, :, Cx:, :],
        bu=b(keys[3]), br=b(keys[4]), bo=b(keys[5]),
    )


# ----------------------------------------------------------------------------
if __name__ == "__main__":
    # ConvGRU(input_size=4, hidden_size=8, kernel_sizes=3, n_layers=2, Conv2d)
    input_size, hidden_size, kernel_size, n_layers = 4, 8, 3, 2
    H = W = 16
    sequence_length = 4
    num_chunks = 2
    T = num_chunks * sequence_length           # frames along dim 0

    key = jax.random.PRNGKey(0)
    kx, *kcells = jax.random.split(key, 1 + n_layers)
    x = jax.random.normal(kx, (T, input_size, H, W), jnp.float32)
    params_list = [init_cell_params(kc, input_size, hidden_size, kernel_size)
                   for kc in kcells]

    out = convgru_forward_pallas(params_list, x, sequence_length=sequence_length)
    out = jax.block_until_ready(out)

    ref = convgru_forward_ref(params_list, x, sequence_length)
    ref = jax.block_until_ready(ref)

    assert out.shape == (T, hidden_size, H, W), out.shape
    assert jnp.all(jnp.isfinite(out))
    max_err = float(jnp.max(jnp.abs(out - ref)))
    assert jnp.allclose(out, ref, atol=2e-3, rtol=2e-3), max_err

    print("KERNEL_OK")
</pallas_src>

<mosaic_0001>
module attributes {stable_mosaic.version = 11 : i64} {
  func.func @convgru_fused_kernel(%arg0: i32, %arg1: i32, %arg2: memref<10xi32, #tpu.memory_space<smem>>, %arg3: memref<1x37x256xf32, #tpu.memory_space<vmem>>, %arg4: memref<1x24x37xf32, #tpu.memory_space<vmem>>, %arg5: memref<1x16x72xf32, #tpu.memory_space<vmem>>, %arg6: memref<1x8x72xf32, #tpu.memory_space<vmem>>, %arg7: memref<1x1x8x256xf32, #tpu.memory_space<vmem>>, %arg8: memref<8x290xf32, #tpu.memory_space<vmem>>, %arg9: memref<8x290xf32, #tpu.memory_space<vmem>>) attributes {dimension_semantics = [#tpu.dimension_semantics<parallel>, #tpu.dimension_semantics<arbitrary>], iteration_bounds = array<i64: 2, 10>, scalar_prefetch = 1 : i64, scratch_operands = 2 : i64, tpu.core_type = #tpu.core_type<tc>, window_params = [{transform_indices = @transform_0, window_bounds = array<i64: 1, 37, 256>}, {transform_indices = @transform_1, window_bounds = array<i64: 1, 24, 37>}, {transform_indices = @transform_2, window_bounds = array<i64: 1, 16, 72>}, {transform_indices = @transform_3, window_bounds = array<i64: 1, 8, 72>}, {transform_indices = @transform_4, window_bounds = array<i64: 1, 1, 8, 256>}]} {
    %c0_i32 = arith.constant 0 : i32
    %0 = arith.cmpi eq, %arg1, %c0_i32 : i32
    %1 = arith.extui %0 : i1 to i32
    %c0_i32_0 = arith.constant 0 : i32
    %2 = arith.cmpi ne, %1, %c0_i32_0 : i32
    scf.if %2 {
      %cst_78 = arith.constant 0.000000e+00 : f32
      %148 = vector.broadcast %cst_78 : f32 to vector<8x290xf32>
      %c0_79 = arith.constant 0 : index
      %c0_80 = arith.constant 0 : index
      %149 = vector.load %arg8[%c0_79, %c0_80] : memref<8x290xf32, #tpu.memory_space<vmem>>, vector<8x290xf32>
      tpu.vector_store %arg8[%c0_79, %c0_80], %148 {strides = array<i32>} : memref<8x290xf32, #tpu.memory_space<vmem>>, vector<8x290xf32>,
      %cst_81 = arith.constant 0.000000e+00 : f32
      %150 = vector.broadcast %cst_81 : f32 to vector<8x290xf32>
      %c0_82 = arith.constant 0 : index
      %c0_83 = arith.constant 0 : index
      %151 = vector.load %arg9[%c0_82, %c0_83] : memref<8x290xf32, #tpu.memory_space<vmem>>, vector<8x290xf32>
      tpu.vector_store %arg9[%c0_82, %c0_83], %150 {strides = array<i32>} : memref<8x290xf32, #tpu.memory_space<vmem>>, vector<8x290xf32>,
    } else {
    }
    %3 = tpu.iota {dimensions = array<i32: 1>} : vector<1x256xi32>
    %c16_i32 = arith.constant 16 : i32
    %c0_i32_1 = arith.constant 0 : i32
    %4 = arith.cmpi eq, %c16_i32, %c0_i32_1 : i32
    %c1_i32 = arith.constant 1 : i32
    %5 = arith.select %4, %c1_i32, %c16_i32 : i32
    %6 = vector.broadcast %5 : i32 to vector<1x256xi32>
    %7 = arith.remsi %3, %6 : vector<1x256xi32>
    %c0_i32_2 = arith.constant 0 : i32
    %8 = vector.broadcast %c0_i32_2 : i32 to vector<1x256xi32>
    %9 = arith.cmpi ne, %7, %8 : vector<1x256xi32>
    %c0_i32_3 = arith.constant 0 : i32
    %10 = vector.broadcast %c0_i32_3 : i32 to vector<1x256xi32>
    %11 = arith.cmpi slt, %7, %10 : vector<1x256xi32>
    %c0_i32_4 = arith.constant 0 : i32
    %12 = arith.cmpi slt, %5, %c0_i32_4 : i32
    %13 = vector.broadcast %12 : i1 to vector<1x256xi1>
    %14 = vector.broadcast %13 : vector<1x256xi1> to vector<1x256xi1>
    %15 = arith.xori %11, %14 : vector<1x256xi1>
    %16 = arith.andi %15, %9 : vector<1x256xi1>
    %17 = vector.broadcast %5 : i32 to vector<1x256xi32>
    %18 = arith.addi %7, %17 : vector<1x256xi32>
    %19 = arith.select %16, %18, %7 : vector<1x256xi1>, vector<1x256xi32>
    %c-1_i32 = arith.constant -1 : i32
    %20 = vector.broadcast %c-1_i32 : i32 to vector<1x256xi32>
    %21 = arith.addi %19, %20 : vector<1x256xi32>
    %c0_i32_5 = arith.constant 0 : i32
    %22 = vector.broadcast %c0_i32_5 : i32 to vector<1x256xi32>
    %23 = arith.cmpi sge, %21, %22 : vector<1x256xi32>
    %c-1_i32_6 = arith.constant -1 : i32
    %24 = vector.broadcast %c-1_i32_6 : i32 to vector<1x256xi32>
    %25 = arith.addi %19, %24 : vector<1x256xi32>
    %c16_i32_7 = arith.constant 16 : i32
    %26 = vector.broadcast %c16_i32_7 : i32 to vector<1x256xi32>
    %27 = arith.cmpi slt, %25, %26 : vector<1x256xi32>
    %28 = arith.andi %23, %27 : vector<1x256xi1>
    %c1_i32_8 = arith.constant 1 : i32
    %29 = vector.broadcast %c1_i32_8 : i32 to vector<1x256xi32>
    %30 = arith.addi %19, %29 : vector<1x256xi32>
    %c0_i32_9 = arith.constant 0 : i32
    %31 = vector.broadcast %c0_i32_9 : i32 to vector<1x256xi32>
    %32 = arith.cmpi sge, %30, %31 : vector<1x256xi32>
    %c1_i32_10 = arith.constant 1 : i32
    %33 = vector.broadcast %c1_i32_10 : i32 to vector<1x256xi32>
    %34 = arith.addi %19, %33 : vector<1x256xi32>
    %c16_i32_11 = arith.constant 16 : i32
    %35 = vector.broadcast %c16_i32_11 : i32 to vector<1x256xi32>
    %36 = arith.cmpi slt, %34, %35 : vector<1x256xi32>
    %37 = arith.andi %32, %36 : vector<1x256xi1>
    %c0 = arith.constant 0 : index
    %c0_12 = arith.constant 0 : index
    %c0_13 = arith.constant 0 : index
    %38 = vector.load %arg4[%c0, %c0_12, %c0_13] : memref<1x24x37xf32, #tpu.memory_space<vmem>>, vector<1x24x37xf32>
    %39 = vector.shape_cast %38 : vector<1x24x37xf32> to vector<24x37xf32>
    %c0_14 = arith.constant 0 : index
    %c0_15 = arith.constant 0 : index
    %c0_16 = arith.constant 0 : index
    %40 = vector.load %arg3[%c0_14, %c0_15, %c0_16] : memref<1x37x256xf32, #tpu.memory_space<vmem>>, vector<1x37x256xf32>
    %41 = vector.shape_cast %40 : vector<1x37x256xf32> to vector<37x256xf32>
    %cst = arith.constant dense<0.000000e+00> : vector<24x256xf32>
    %42 = tpu.matmul %39, %41, %cst {dimension_numbers = #tpu.dot_dimension_numbers<[1], [0], [0], [1], [0, 0, 1, 1], [], []>} : vector<24x37xf32>, vector<37x256xf32>, vector<24x256xf32> -> vector<24x256xf32>
    %c0_17 = arith.constant 0 : index
    %c0_18 = arith.constant 0 : index
    %43 = vector.load %arg8[%c0_17, %c0_18] : memref<8x290xf32, #tpu.memory_space<vmem>>, vector<8x256xf32>
    %cst_19 = arith.constant 0.000000e+00 : f32
    %44 = vector.shape_cast %28 : vector<1x256xi1> to vector<1x256xi1>
    %45 = vector.broadcast %44 : vector<1x256xi1> to vector<8x256xi1>
    %46 = vector.broadcast %cst_19 : f32 to vector<8x256xf32>
    %47 = arith.select %45, %43, %46 : vector<8x256xi1>, vector<8x256xf32>
    %c0_20 = arith.constant 0 : index
    %c1 = arith.constant 1 : index
    %48 = vector.load %arg8[%c0_20, %c1] : memref<8x290xf32, #tpu.memory_space<vmem>>, vector<8x256xf32>
    %c0_21 = arith.constant 0 : index
    %c2 = arith.constant 2 : index
    %49 = vector.load %arg8[%c0_21, %c2] : memref<8x290xf32, #tpu.memory_space<vmem>>, vector<8x256xf32>
    %cst_22 = arith.constant 0.000000e+00 : f32
    %50 = vector.shape_cast %37 : vector<1x256xi1> to vector<1x256xi1>
    %51 = vector.broadcast %50 : vector<1x256xi1> to vector<8x256xi1>
    %52 = vector.broadcast %cst_22 : f32 to vector<8x256xf32>
    %53 = arith.select %51, %49, %52 : vector<8x256xi1>, vector<8x256xf32>
    %c0_23 = arith.constant 0 : index
    %c16 = arith.constant 16 : index
    %54 = vector.load %arg8[%c0_23, %c16] : memref<8x290xf32, #tpu.memory_space<vmem>>, vector<8x256xf32>
    %cst_24 = arith.constant 0.000000e+00 : f32
    %55 = vector.shape_cast %28 : vector<1x256xi1> to vector<1x256xi1>
    %56 = vector.broadcast %55 : vector<1x256xi1> to vector<8x256xi1>
    %57 = vector.broadcast %cst_24 : f32 to vector<8x256xf32>
    %58 = arith.select %56, %54, %57 : vector<8x256xi1>, vector<8x256xf32>
    %c0_25 = arith.constant 0 : index
    %c17 = arith.constant 17 : index
    %59 = vector.load %arg8[%c0_25, %c17] : memref<8x290xf32, #tpu.memory_space<vmem>>, vector<8x256xf32>
    %c0_26 = arith.constant 0 : index
    %c18 = arith.constant 18 : index
    %60 = vector.load %arg8[%c0_26, %c18] : memref<8x290xf32, #tpu.memory_space<vmem>>, vector<8x256xf32>
    %cst_27 = arith.constant 0.000000e+00 : f32
    %61 = vector.shape_cast %37 : vector<1x256xi1> to vector<1x256xi1>
    %62 = vector.broadcast %61 : vector<1x256xi1> to vector<8x256xi1>
    %63 = vector.broadcast %cst_27 : f32 to vector<8x256xf32>
    %64 = arith.select %62, %60, %63 : vector<8x256xi1>, vector<8x256xf32>
    %c0_28 = arith.constant 0 : index
    %c32 = arith.constant 32 : index
    %65 = vector.load %arg8[%c0_28, %c32] : memref<8x290xf32, #tpu.memory_space<vmem>>, vector<8x256xf32>
    %cst_29 = arith.constant 0.000000e+00 : f32
    %66 = vector.shape_cast %28 : vector<1x256xi1> to vector<1x256xi1>
    %67 = vector.broadcast %66 : vector<1x256xi1> to vector<8x256xi1>
    %68 = vector.broadcast %cst_29 : f32 to vector<8x256xf32>
    %69 = arith.select %67, %65, %68 : vector<8x256xi1>, vector<8x256xf32>
    %c0_30 = arith.constant 0 : index
    %c33 = arith.constant 33 : index
    %70 = vector.load %arg8[%c0_30, %c33] : memref<8x290xf32, #tpu.memory_space<vmem>>, vector<8x256xf32>
    %c0_31 = arith.constant 0 : index
    %c34 = arith.constant 34 : index
    %71 = vector.load %arg8[%c0_31, %c34] : memref<8x290xf32, #tpu.memory_space<vmem>>, vector<8x256xf32>
    %cst_32 = arith.constant 0.000000e+00 : f32
    %72 = vector.shape_cast %37 : vector<1x256xi1> to vector<1x256xi1>
    %73 = vector.broadcast %72 : vector<1x256xi1> to vector<8x256xi1>
    %74 = vector.broadcast %cst_32 : f32 to vector<8x256xf32>
    %75 = arith.select %73, %71, %74 : vector<8x256xi1>, vector<8x256xf32>
    %76 = tpu.concatenate %47, %48, %53, %58, %59, %64, %69, %70, %75 in 0 : vector<8x256xf32>, vector<8x256xf32>, vector<8x256xf32>, vector<8x256xf32>, vector<8x256xf32>, vector<8x256xf32>, vector<8x256xf32>, vector<8x256xf32>, vector<8x256xf32> -> vector<72x256xf32>
    %c0_33 = arith.constant 0 : index
    %c0_34 = arith.constant 0 : index
    %c0_35 = arith.constant 0 : index
    %77 = vector.load %arg5[%c0_33, %c0_34, %c0_35] : memref<1x16x72xf32, #tpu.memory_space<vmem>>, vector<1x16x72xf32>
    %78 = vector.shape_cast %77 : vector<1x16x72xf32> to vector<16x72xf32>
    %cst_36 = arith.constant dense<0.000000e+00> : vector<16x256xf32>
    %79 = tpu.matmul %78, %76, %cst_36 {dimension_numbers = #tpu.dot_dimension_numbers<[1], [0], [0], [1], [0, 0, 1, 1], [], []>} : vector<16x72xf32>, vector<72x256xf32>, vector<16x256xf32> -> vector<16x256xf32>
    %80 = vector.extract_strided_slice %42 {offsets = [0, 0], sizes = [8, 256], strides = [1, 1]} : vector<24x256xf32> to vector<8x256xf32>
    %81 = vector.extract_strided_slice %79 {offsets = [0, 0], sizes = [8, 256], strides = [1, 1]} : vector<16x256xf32> to vector<8x256xf32>
    %82 = arith.addf %80, %81 : vector<8x256xf32>
    %83 = arith.negf %82 : vector<8x256xf32>
    %84 = math.exp %83 : vector<8x256xf32>
    %cst_37 = arith.constant 1.000000e+00 : f32
    %85 = vector.broadcast %cst_37 : f32 to vector<8x256xf32>
    %86 = arith.addf %85, %84 : vector<8x256xf32>
    %87 = arith.divf %85, %86 : vector<8x256xf32>
    %88 = vector.extract_strided_slice %42 {offsets = [8, 0], sizes = [8, 256], strides = [1, 1]} : vector<24x256xf32> to vector<8x256xf32>
    %89 = vector.extract_strided_slice %79 {offsets = [8, 0], sizes = [8, 256], strides = [1, 1]} : vector<16x256xf32> to vector<8x256xf32>
    %90 = arith.addf %88, %89 : vector<8x256xf32>
    %91 = arith.negf %90 : vector<8x256xf32>
    %92 = math.exp %91 : vector<8x256xf32>
    %cst_38 = arith.constant 1.000000e+00 : f32
    %93 = vector.broadcast %cst_38 : f32 to vector<8x256xf32>
    %94 = arith.addf %93, %92 : vector<8x256xf32>
    %95 = arith.divf %93, %94 : vector<8x256xf32>
    %c0_39 = arith.constant 0 : index
    %c17_40 = arith.constant 17 : index
    %96 = vector.load %arg8[%c0_39, %c17_40] : memref<8x290xf32, #tpu.memory_space<vmem>>, vector<8x256xf32>
    %97 = arith.mulf %96, %95 : vector<8x256xf32>
    %c0_41 = arith.constant 0 : index
    %c17_42 = arith.constant 17 : index
    %98 = vector.load %arg9[%c0_41, %c17_42] : memref<8x290xf32, #tpu.memory_space<vmem>>, vector<8x256xf32>
    tpu.vector_store %arg9[%c0_41, %c17_42], %97 {strides = array<i32>} : memref<8x290xf32, #tpu.memory_space<vmem>>, vector<8x256xf32>,
    %c0_43 = arith.constant 0 : index
    %c0_44 = arith.constant 0 : index
    %99 = vector.load %arg9[%c0_43, %c0_44] : memref<8x290xf32, #tpu.memory_space<vmem>>, vector<8x256xf32>
    %cst_45 = arith.constant 0.000000e+00 : f32
    %100 = vector.shape_cast %28 : vector<1x256xi1> to vector<1x256xi1>
    %101 = vector.broadcast %100 : vector<1x256xi1> to vector<8x256xi1>
    %102 = vector.broadcast %cst_45 : f32 to vector<8x256xf32>
    %103 = arith.select %101, %99, %102 : vector<8x256xi1>, vector<8x256xf32>
    %c0_46 = arith.constant 0 : index
    %c1_47 = arith.constant 1 : index
    %104 = vector.load %arg9[%c0_46, %c1_47] : memref<8x290xf32, #tpu.memory_space<vmem>>, vector<8x256xf32>
    %c0_48 = arith.constant 0 : index
    %c2_49 = arith.constant 2 : index
    %105 = vector.load %arg9[%c0_48, %c2_49] : memref<8x290xf32, #tpu.memory_space<vmem>>, vector<8x256xf32>
    %cst_50 = arith.constant 0.000000e+00 : f32
    %106 = vector.shape_cast %37 : vector<1x256xi1> to vector<1x256xi1>
    %107 = vector.broadcast %106 : vector<1x256xi1> to vector<8x256xi1>
    %108 = vector.broadcast %cst_50 : f32 to vector<8x256xf32>
    %109 = arith.select %107, %105, %108 : vector<8x256xi1>, vector<8x256xf32>
    %c0_51 = arith.constant 0 : index
    %c16_52 = arith.constant 16 : index
    %110 = vector.load %arg9[%c0_51, %c16_52] : memref<8x290xf32, #tpu.memory_space<vmem>>, vector<8x256xf32>
    %cst_53 = arith.constant 0.000000e+00 : f32
    %111 = vector.shape_cast %28 : vector<1x256xi1> to vector<1x256xi1>
    %112 = vector.broadcast %111 : vector<1x256xi1> to vector<8x256xi1>
    %113 = vector.broadcast %cst_53 : f32 to vector<8x256xf32>
    %114 = arith.select %112, %110, %113 : vector<8x256xi1>, vector<8x256xf32>
    %c0_54 = arith.constant 0 : index
    %c17_55 = arith.constant 17 : index
    %115 = vector.load %arg9[%c0_54, %c17_55] : memref<8x290xf32, #tpu.memory_space<vmem>>, vector<8x256xf32>
    %c0_56 = arith.constant 0 : index
    %c18_57 = arith.constant 18 : index
    %116 = vector.load %arg9[%c0_56, %c18_57] : memref<8x290xf32, #tpu.memory_space<vmem>>, vector<8x256xf32>
    %cst_58 = arith.constant 0.000000e+00 : f32
    %117 = vector.shape_cast %37 : vector<1x256xi1> to vector<1x256xi1>
    %118 = vector.broadcast %117 : vector<1x256xi1> to vector<8x256xi1>
    %119 = vector.broadcast %cst_58 : f32 to vector<8x256xf32>
    %120 = arith.select %118, %116, %119 : vector<8x256xi1>, vector<8x256xf32>
    %c0_59 = arith.constant 0 : index
    %c32_60 = arith.constant 32 : index
    %121 = vector.load %arg9[%c0_59, %c32_60] : memref<8x290xf32, #tpu.memory_space<vmem>>, vector<8x256xf32>
    %cst_61 = arith.constant 0.000000e+00 : f32
    %122 = vector.shape_cast %28 : vector<1x256xi1> to vector<1x256xi1>
    %123 = vector.broadcast %122 : vector<1x256xi1> to vector<8x256xi1>
    %124 = vector.broadcast %cst_61 : f32 to vector<8x256xf32>
    %125 = arith.select %123, %121, %124 : vector<8x256xi1>, vector<8x256xf32>
    %c0_62 = arith.constant 0 : index
    %c33_63 = arith.constant 33 : index
    %126 = vector.load %arg9[%c0_62, %c33_63] : memref<8x290xf32, #tpu.memory_space<vmem>>, vector<8x256xf32>
    %c0_64 = arith.constant 0 : index
    %c34_65 = arith.constant 34 : index
    %127 = vector.load %arg9[%c0_64, %c34_65] : memref<8x290xf32, #tpu.memory_space<vmem>>, vector<8x256xf32>
    %cst_66 = arith.constant 0.000000e+00 : f32
    %128 = vector.shape_cast %37 : vector<1x256xi1> to vector<1x256xi1>
    %129 = vector.broadcast %128 : vector<1x256xi1> to vector<8x256xi1>
    %130 = vector.broadcast %cst_66 : f32 to vector<8x256xf32>
    %131 = arith.select %129, %127, %130 : vector<8x256xi1>, vector<8x256xf32>
    %132 = tpu.concatenate %103, %104, %109, %114, %115, %120, %125, %126, %131 in 0 : vector<8x256xf32>, vector<8x256xf32>, vector<8x256xf32>, vector<8x256xf32>, vector<8x256xf32>, vector<8x256xf32>, vector<8x256xf32>, vector<8x256xf32>, vector<8x256xf32> -> vector<72x256xf32>
    %c0_67 = arith.constant 0 : index
    %c0_68 = arith.constant 0 : index
    %c0_69 = arith.constant 0 : index
    %133 = vector.load %arg6[%c0_67, %c0_68, %c0_69] : memref<1x8x72xf32, #tpu.memory_space<vmem>>, vector<1x8x72xf32>
    %134 = vector.shape_cast %133 : vector<1x8x72xf32> to vector<8x72xf32>
    %cst_70 = arith.constant dense<0.000000e+00> : vector<8x256xf32>
    %135 = tpu.matmul %134, %132, %cst_70 {dimension_numbers = #tpu.dot_dimension_numbers<[1], [0], [0], [1], [0, 0, 1, 1], [], []>} : vector<8x72xf32>, vector<72x256xf32>, vector<8x256xf32> -> vector<8x256xf32>
    %136 = vector.extract_strided_slice %42 {offsets = [16, 0], sizes = [8, 256], strides = [1, 1]} : vector<24x256xf32> to vector<8x256xf32>
    %137 = arith.addf %136, %135 : vector<8x256xf32>
    %138 = math.tanh %137 : vector<8x256xf32>
    %cst_71 = arith.constant 1.000000e+00 : f32
    %139 = vector.broadcast %cst_71 : f32 to vector<8x256xf32>
    %140 = arith.subf %139, %87 : vector<8x256xf32>
    %141 = arith.mulf %96, %140 : vector<8x256xf32>
    %142 = arith.mulf %138, %87 : vector<8x256xf32>
    %143 = arith.addf %141, %142 : vector<8x256xf32>
    %c0_72 = arith.constant 0 : index
    %c17_73 = arith.constant 17 : index
    %144 = vector.load %arg8[%c0_72, %c17_73] : memref<8x290xf32, #tpu.memory_space<vmem>>, vector<8x256xf32>
    tpu.vector_store %arg8[%c0_72, %c17_73], %143 {strides = array<i32>} : memref<8x290xf32, #tpu.memory_space<vmem>>, vector<8x256xf32>,
    %c0_74 = arith.constant 0 : index
    %c0_75 = arith.constant 0 : index
    %c0_76 = arith.constant 0 : index
    %c0_77 = arith.constant 0 : index
    %145 = vector.load %arg7[%c0_74, %c0_75, %c0_76, %c0_77] : memref<1x1x8x256xf32, #tpu.memory_space<vmem>>, vector<1x1x8x256xf32>
    %146 = vector.shape_cast %145 : vector<1x1x8x256xf32> to vector<8x256xf32>
    %147 = vector.shape_cast %143 : vector<8x256xf32> to vector<1x1x8x256xf32>
    tpu.vector_store %arg7[%c0_74, %c0_75, %c0_76, %c0_77], %147 {strides = array<i32>} : memref<1x1x8x256xf32, #tpu.memory_space<vmem>>, vector<1x1x8x256xf32>,
    return
  }
  func.func @transform_0(%arg0: i32, %arg1: i32, %arg2: memref<10xi32, #tpu.memory_space<smem>>) -> (i32, i32, i32) {
    %0 = arith.index_cast %arg1 : i32 to index
    %1 = memref.load %arg2[%0] : memref<10xi32, #tpu.memory_space<smem>>
    %c0_i32 = arith.constant 0 : i32
    %c0_i32_0 = arith.constant 0 : i32
    %c0_i32_1 = arith.constant 0 : i32
    return %1, %c0_i32, %c0_i32_0 : i32, i32, i32
  }
  func.func @transform_1(%arg0: i32, %arg1: i32, %arg2: memref<10xi32, #tpu.memory_space<smem>>) -> (i32, i32, i32) {
    %c0_i32 = arith.constant 0 : i32
    %c0_i32_0 = arith.constant 0 : i32
    %c0_i32_1 = arith.constant 0 : i32
    return %arg0, %c0_i32, %c0_i32_0 : i32, i32, i32
  }
  func.func @transform_2(%arg0: i32, %arg1: i32, %arg2: memref<10xi32, #tpu.memory_space<smem>>) -> (i32, i32, i32) {
    %c0_i32 = arith.constant 0 : i32
    %c0_i32_0 = arith.constant 0 : i32
    %c0_i32_1 = arith.constant 0 : i32
    return %arg0, %c0_i32, %c0_i32_0 : i32, i32, i32
  }
  func.func @transform_3(%arg0: i32, %arg1: i32, %arg2: memref<10xi32, #tpu.memory_space<smem>>) -> (i32, i32, i32) {
    %c0_i32 = arith.constant 0 : i32
    %c0_i32_0 = arith.constant 0 : i32
    %c0_i32_1 = arith.constant 0 : i32
    return %arg0, %c0_i32, %c0_i32_0 : i32, i32, i32
  }
  func.func @transform_4(%arg0: i32, %arg1: i32, %arg2: memref<10xi32, #tpu.memory_space<smem>>) -> (i32, i32, i32, i32) {
    %c0_i32 = arith.constant 0 : i32
    %c0_i32_0 = arith.constant 0 : i32
    %c0_i32_1 = arith.constant 0 : i32
    return %arg0, %arg1, %c0_i32, %c0_i32_0 : i32, i32, i32, i32
  }
}

</mosaic_0001>

<llo_original>
// kernel: squeeze.1
$region0: #{squeeze.1}
  %s0 = inlined_call_operand.vmem [shape: f32[1,10,8,256], index: 0, kind: input, shape index: {}]
  %s1 = inlined_call_operand.vmem [shape: f32[2,5,8,16,16], index: 1, kind: output, shape index: {}]
  %v2 = vld [vmem:[%s0] sm:$0xff]
  %vm3 = vcmask 130048
  %4 = vst.msk [vmem:[%s1] ss:$16 sm:$0x3] %vm3, %v2
  %5 = vst.msk [vmem:[%s1] ss:$16 sm:$0xc] %vm3, %v2
  %6 = vst.msk [vmem:[%s1] ss:$16 sm:$0x30] %vm3, %v2
  %7 = vst.msk [vmem:[%s1] ss:$16 sm:$0xc0] %vm3, %v2
  %s8 = scalar_lea.vmem %s0, 8
  %v9 = vld [vmem:[%s8] sm:$0xff]
  %vm10 = vcmask 130048
  %s11 = scalar_lea.vmem %s1, 8
  %12 = vst.msk [vmem:[%s11] ss:$16 sm:$0x3] %vm10, %v9
  %s13 = scalar_lea.vmem %s1, 8
  %14 = vst.msk [vmem:[%s13] ss:$16 sm:$0xc] %vm10, %v9
  %s15 = scalar_lea.vmem %s1, 8
  %16 = vst.msk [vmem:[%s15] ss:$16 sm:$0x30] %vm10, %v9
  %s17 = scalar_lea.vmem %s1, 8
  %18 = vst.msk [vmem:[%s17] ss:$16 sm:$0xc0] %vm10, %v9
  %s19 = scalar_lea.vmem %s0, 16
  %v20 = vld [vmem:[%s19] sm:$0xff]
  %vm21 = vcmask 130048
  %s22 = scalar_lea.vmem %s1, 128
  %23 = vst.msk [vmem:[%s22] ss:$16 sm:$0x3] %vm21, %v20
  %s24 = scalar_lea.vmem %s1, 128
  %25 = vst.msk [vmem:[%s24] ss:$16 sm:$0xc] %vm21, %v20
  %s26 = scalar_lea.vmem %s1, 128
  %27 = vst.msk [vmem:[%s26] ss:$16 sm:$0x30] %vm21, %v20
  %s28 = scalar_lea.vmem %s1, 128
  %29 = vst.msk [vmem:[%s28] ss:$16 sm:$0xc0] %vm21, %v20
  %s30 = scalar_lea.vmem %s0, 24
  %v31 = vld [vmem:[%s30] sm:$0xff]
  %vm32 = vcmask 130048
  %s33 = scalar_lea.vmem %s1, 136
  %34 = vst.msk [vmem:[%s33] ss:$16 sm:$0x3] %vm32, %v31
  %s35 = scalar_lea.vmem %s1, 136
  %36 = vst.msk [vmem:[%s35] ss:$16 sm:$0xc] %vm32, %v31
  %s37 = scalar_lea.vmem %s1, 136
  %38 = vst.msk [vmem:[%s37] ss:$16 sm:$0x30] %vm32, %v31
  %s39 = scalar_lea.vmem %s1, 136
  %40 = vst.msk [vmem:[%s39] ss:$16 sm:$0xc0] %vm32, %v31
  %s41 = scalar_lea.vmem %s0, 32
  %v42 = vld [vmem:[%s41] sm:$0xff]
  %vm43 = vcmask 130048
  %s44 = scalar_lea.vmem %s1, 256
  %45 = vst.msk [vmem:[%s44] ss:$16 sm:$0x3] %vm43, %v42
  %s46 = scalar_lea.vmem %s1, 256
  %47 = vst.msk [vmem:[%s46] ss:$16 sm:$0xc] %vm43, %v42
  %s48 = scalar_lea.vmem %s1, 256
  %49 = vst.msk [vmem:[%s48] ss:$16 sm:$0x30] %vm43, %v42
  %s50 = scalar_lea.vmem %s1, 256
  %51 = vst.msk [vmem:[%s50] ss:$16 sm:$0xc0] %vm43, %v42
  %s52 = scalar_lea.vmem %s0, 40
  %v53 = vld [vmem:[%s52] sm:$0xff]
  %vm54 = vcmask 130048
  %s55 = scalar_lea.vmem %s1, 264
  %56 = vst.msk [vmem:[%s55] ss:$16 sm:$0x3] %vm54, %v53
  %s57 = scalar_lea.vmem %s1, 264
  %58 = vst.msk [vmem:[%s57] ss:$16 sm:$0xc] %vm54, %v53
  %s59 = scalar_lea.vmem %s1, 264
  %60 = vst.msk [vmem:[%s59] ss:$16 sm:$0x30] %vm54, %v53
  %s61 = scalar_lea.vmem %s1, 264
  %62 = vst.msk [vmem:[%s61] ss:$16 sm:$0xc0] %vm54, %v53
  %s63 = scalar_lea.vmem %s0, 48
  %v64 = vld [vmem:[%s63] sm:$0xff]
  %vm65 = vcmask 130048
  %s66 = scalar_lea.vmem %s1, 384
  %67 = vst.msk [vmem:[%s66] ss:$16 sm:$0x3] %vm65, %v64
  %s68 = scalar_lea.vmem %s1, 384
  %69 = vst.msk [vmem:[%s68] ss:$16 sm:$0xc] %vm65, %v64
  %s70 = scalar_lea.vmem %s1, 384
  %71 = vst.msk [vmem:[%s70] ss:$16 sm:$0x30] %vm65, %v64
  %s72 = scalar_lea.vmem %s1, 384
  %73 = vst.msk [vmem:[%s72] ss:$16 sm:$0xc0] %vm65, %v64
  %s74 = scalar_lea.vmem %s0, 56
  %v75 = vld [vmem:[%s74] sm:$0xff]
  %vm76 = vcmask 130048
  %s77 = scalar_lea.vmem %s1, 392
  %78 = vst.msk [vmem:[%s77] ss:$16 sm:$0x3] %vm76, %v75
  %s79 = scalar_lea.vmem %s1, 392
  %80 = vst.msk [vmem:[%s79] ss:$16 sm:$0xc] %vm76, %v75
  %s81 = scalar_lea.vmem %s1, 392
  %82 = vst.msk [vmem:[%s81] ss:$16 sm:$0x30] %vm76, %v75
  %s83 = scalar_lea.vmem %s1, 392
  %84 = vst.msk [vmem:[%s83] ss:$16 sm:$0xc0] %vm76, %v75
  %s85 = scalar_lea.vmem %s0, 64
  %v86 = vld [vmem:[%s85] sm:$0xff]
  %vm87 = vcmask 130048
  %s88 = scalar_lea.vmem %s1, 512
  %89 = vst.msk [vmem:[%s88] ss:$16 sm:$0x3] %vm87, %v86
  %s90 = scalar_lea.vmem %s1, 512
  %91 = vst.msk [vmem:[%s90] ss:$16 sm:$0xc] %vm87, %v86
  %s92 = scalar_lea.vmem %s1, 512
  %93 = vst.msk [vmem:[%s92] ss:$16 sm:$0x30] %vm87, %v86
  %s94 = scalar_lea.vmem %s1, 512
  %95 = vst.msk [vmem:[%s94] ss:$16 sm:$0xc0] %vm87, %v86
  %s96 = scalar_lea.vmem %s0, 72
  %v97 = vld [vmem:[%s96] sm:$0xff]
  %vm98 = vcmask 130048
  %s99 = scalar_lea.vmem %s1, 520
  %100 = vst.msk [vmem:[%s99] ss:$16 sm:$0x3] %vm98, %v97
  %s101 = scalar_lea.vmem %s1, 520
  %102 = vst.msk [vmem:[%s101] ss:$16 sm:$0xc] %vm98, %v97
  %s103 = scalar_lea.vmem %s1, 520
  %104 = vst.msk [vmem:[%s103] ss:$16 sm:$0x30] %vm98, %v97
  %s105 = scalar_lea.vmem %s1, 520
  %106 = vst.msk [vmem:[%s105] ss:$16 sm:$0xc0] %vm98, %v97
  %s107 = scalar_lea.vmem %s0, 80
  %v108 = vld [vmem:[%s107] sm:$0xff]
  %vm109 = vcmask 130048
  %s110 = scalar_lea.vmem %s1, 640
  %111 = vst.msk [vmem:[%s110] ss:$16 sm:$0x3] %vm109, %v108
  %s112 = scalar_lea.vmem %s1, 640
  %113 = vst.msk [vmem:[%s112] ss:$16 sm:$0xc] %vm109, %v108
  %s114 = scalar_lea.vmem %s1, 640
  %115 = vst.msk [vmem:[%s114] ss:$16 sm:$0x30] %vm109, %v108
  %s116 = scalar_lea.vmem %s1, 640
  %117 = vst.msk [vmem:[%s116] ss:$16 sm:$0xc0] %vm109, %v108
  %s118 = scalar_lea.vmem %s0, 88
  %v119 = vld [vmem:[%s118] sm:$0xff]
  %vm120 = vcmask 130048
  %s121 = scalar_lea.vmem %s1, 648
  %122 = vst.msk [vmem:[%s121] ss:$16 sm:$0x3] %vm120, %v119
  %s123 = scalar_lea.vmem %s1, 648
  %124 = vst.msk [vmem:[%s123] ss:$16 sm:$0xc] %vm120, %v119
  %s125 = scalar_lea.vmem %s1, 648
  %126 = vst.msk [vmem:[%s125] ss:$16 sm:$0x30] %vm120, %v119
  %s127 = scalar_lea.vmem %s1, 648
  %128 = vst.msk [vmem:[%s127] ss:$16 sm:$0xc0] %vm120, %v119
  %s129 = scalar_lea.vmem %s0, 96
  %v130 = vld [vmem:[%s129] sm:$0xff]
  %vm131 = vcmask 130048
  %s132 = scalar_lea.vmem %s1, 768
  %133 = vst.msk [vmem:[%s132] ss:$16 sm:$0x3] %vm131, %v130
  %s134 = scalar_lea.vmem %s1, 768
  %135 = vst.msk [vmem:[%s134] ss:$16 sm:$0xc] %vm131, %v130
  %s136 = scalar_lea.vmem %s1, 768
  %137 = vst.msk [vmem:[%s136] ss:$16 sm:$0x30] %vm131, %v130
  %s138 = scalar_lea.vmem %s1, 768
  %139 = vst.msk [vmem:[%s138] ss:$16 sm:$0xc0] %vm131, %v130
  %s140 = scalar_lea.vmem %s0, 104
  %v141 = vld [vmem:[%s140] sm:$0xff]
  %vm142 = vcmask 130048
  %s143 = scalar_lea.vmem %s1, 776
  %144 = vst.msk [vmem:[%s143] ss:$16 sm:$0x3] %vm142, %v141
  %s145 = scalar_lea.vmem %s1, 776
  %146 = vst.msk [vmem:[%s145] ss:$16 sm:$0xc] %vm142, %v141
  %s147 = scalar_lea.vmem %s1, 776
  %148 = vst.msk [vmem:[%s147] ss:$16 sm:$0x30] %vm142, %v141
  %s149 = scalar_lea.vmem %s1, 776
  %150 = vst.msk [vmem:[%s149] ss:$16 sm:$0xc0] %vm142, %v141
  %s151 = scalar_lea.vmem %s0, 112
  %v152 = vld [vmem:[%s151] sm:$0xff]
  %vm153 = vcmask 130048
  %s154 = scalar_lea.vmem %s1, 896
  %155 = vst.msk [vmem:[%s154] ss:$16 sm:$0x3] %vm153, %v152
  %s156 = scalar_lea.vmem %s1, 896
  %157 = vst.msk [vmem:[%s156] ss:$16 sm:$0xc] %vm153, %v152
  %s158 = scalar_lea.vmem %s1, 896
  %159 = vst.msk [vmem:[%s158] ss:$16 sm:$0x30] %vm153, %v152
  %s160 = scalar_lea.vmem %s1, 896
  %161 = vst.msk [vmem:[%s160] ss:$16 sm:$0xc0] %vm153, %v152
  %s162 = scalar_lea.vmem %s0, 120
  %v163 = vld [vmem:[%s162] sm:$0xff]
  %vm164 = vcmask 130048
  %s165 = scalar_lea.vmem %s1, 904
  %166 = vst.msk [vmem:[%s165] ss:$16 sm:$0x3] %vm164, %v163
  %s167 = scalar_lea.vmem %s1, 904
  %168 = vst.msk [vmem:[%s167] ss:$16 sm:$0xc] %vm164, %v163
  %s169 = scalar_lea.vmem %s1, 904
  %170 = vst.msk [vmem:[%s169] ss:$16 sm:$0x30] %vm164, %v163
  %s171 = scalar_lea.vmem %s1, 904
  %172 = vst.msk [vmem:[%s171] ss:$16 sm:$0xc0] %vm164, %v163
  %s173 = scalar_lea.vmem %s0, 128
  %v174 = vld [vmem:[%s173] sm:$0xff]
  %vm175 = vcmask 130048
  %s176 = scalar_lea.vmem %s1, 1024
  %177 = vst.msk [vmem:[%s176] ss:$16 sm:$0x3] %vm175, %v174
  %s178 = scalar_lea.vmem %s1, 1024
  %179 = vst.msk [vmem:[%s178] ss:$16 sm:$0xc] %vm175, %v174
  %s180 = scalar_lea.vmem %s1, 1024
  %181 = vst.msk [vmem:[%s180] ss:$16 sm:$0x30] %vm175, %v174
  %s182 = scalar_lea.vmem %s1, 1024
  %183 = vst.msk [vmem:[%s182] ss:$16 sm:$0xc0] %vm175, %v174
  %s184 = scalar_lea.vmem %s0, 136
  %v185 = vld [vmem:[%s184] sm:$0xff]
  %vm186 = vcmask 130048
  %s187 = scalar_lea.vmem %s1, 1032
  %188 = vst.msk [vmem:[%s187] ss:$16 sm:$0x3] %vm186, %v185
  %s189 = scalar_lea.vmem %s1, 1032
  %190 = vst.msk [vmem:[%s189] ss:$16 sm:$0xc] %vm186, %v185
  %s191 = scalar_lea.vmem %s1, 1032
  %192 = vst.msk [vmem:[%s191] ss:$16 sm:$0x30] %vm186, %v185
  %s193 = scalar_lea.vmem %s1, 1032
  %194 = vst.msk [vmem:[%s193] ss:$16 sm:$0xc0] %vm186, %v185
  %s195 = scalar_lea.vmem %s0, 144
  %v196 = vld [vmem:[%s195] sm:$0xff]
  %vm197 = vcmask 130048
  %s198 = scalar_lea.vmem %s1, 1152
  %199 = vst.msk [vmem:[%s198] ss:$16 sm:$0x3] %vm197, %v196
  %s200 = scalar_lea.vmem %s1, 1152
  %201 = vst.msk [vmem:[%s200] ss:$16 sm:$0xc] %vm197, %v196
  %s202 = scalar_lea.vmem %s1, 1152
  %203 = vst.msk [vmem:[%s202] ss:$16 sm:$0x30] %vm197, %v196
  %s204 = scalar_lea.vmem %s1, 1152
  %205 = vst.msk [vmem:[%s204] ss:$16 sm:$0xc0] %vm197, %v196
  %s206 = scalar_lea.vmem %s0, 152
  %v207 = vld [vmem:[%s206] sm:$0xff]
  %vm208 = vcmask 130048
  %s209 = scalar_lea.vmem %s1, 1160
  %210 = vst.msk [vmem:[%s209] ss:$16 sm:$0x3] %vm208, %v207
  %s211 = scalar_lea.vmem %s1, 1160
  %212 = vst.msk [vmem:[%s211] ss:$16 sm:$0xc] %vm208, %v207
  %s213 = scalar_lea.vmem %s1, 1160
  %214 = vst.msk [vmem:[%s213] ss:$16 sm:$0x30] %vm208, %v207
  %s215 = scalar_lea.vmem %s1, 1160
  %216 = vst.msk [vmem:[%s215] ss:$16 sm:$0xc0] %vm208, %v207
  %v217 = vld.sshfl [vmem:[%s0] sm:$0xff pattern:$0xb3a29180]
  %218 = vrot.lane.b32.xlu0 %v217, 112
  %v219 = vpop.permute.xlu0 %218
  %vm220 = vcmask 130048
  %s221 = scalar_lea.vmem %s1, 1
  %222 = vst.msk [vmem:[%s221] ss:$8 sm:$0xf] %vm220, %v219
  %s223 = scalar_lea.vmem %s1, 1
  %224 = vst.msk [vmem:[%s223] ss:$8 sm:$0xf0] %vm220, %v219
  %s225 = scalar_lea.vmem %s0, 4
  %v226 = vld.sshfl [vmem:[%s225] sm:$0xff pattern:$0xb3a29180]
  %227 = vrot.lane.b32.xlu0 %v226, 112
  %v228 = vpop.permute.xlu0 %227
  %vm229 = vcmask 130048
  %s230 = scalar_lea.vmem %s1, 65
  %231 = vst.msk [vmem:[%s230] ss:$8 sm:$0xf] %vm229, %v228
  %s232 = scalar_lea.vmem %s1, 65
  %233 = vst.msk [vmem:[%s232] ss:$8 sm:$0xf0] %vm229, %v228
  %s234 = scalar_lea.vmem %s0, 16
  %v235 = vld.sshfl [vmem:[%s234] sm:$0xff pattern:$0xb3a29180]
  %236 = vrot.lane.b32.xlu0 %v235, 112
  %v237 = vpop.permute.xlu0 %236
  %vm238 = vcmask 130048
  %s239 = scalar_lea.vmem %s1, 129
  %240 = vst.msk [vmem:[%s239] ss:$8 sm:$0xf] %vm238, %v237
  %s241 = scalar_lea.vmem %s1, 129
  %242 = vst.msk [vmem:[%s241] ss:$8 sm:$0xf0] %vm238, %v237
  %s243 = scalar_lea.vmem %s0, 20
  %v244 = vld.sshfl [vmem:[%s243] sm:$0xff pattern:$0xb3a29180]
  %245 = vrot.lane.b32.xlu0 %v244, 112
  %v246 = vpop.permute.xlu0 %245
  %vm247 = vcmask 130048
  %s248 = scalar_lea.vmem %s1, 193
  %249 = vst.msk [vmem:[%s248] ss:$8 sm:$0xf] %vm247, %v246
  %s250 = scalar_lea.vmem %s1, 193
  %251 = vst.msk [vmem:[%s250] ss:$8 sm:$0xf0] %vm247, %v246
  %s252 = scalar_lea.vmem %s0, 32
  %v253 = vld.sshfl [vmem:[%s252] sm:$0xff pattern:$0xb3a29180]
  %254 = vrot.lane.b32.xlu0 %v253, 112
  %v255 = vpop.permute.xlu0 %254
  %vm256 = vcmask 130048
  %s257 = scalar_lea.vmem %s1, 257
  %258 = vst.msk [vmem:[%s257] ss:$8 sm:$0xf] %vm256, %v255
  %s259 = scalar_lea.vmem %s1, 257
  %260 = vst.msk [vmem:[%s259] ss:$8 sm:$0xf0] %vm256, %v255
  %s261 = scalar_lea.vmem %s0, 36
  %v262 = vld.sshfl [vmem:[%s261] sm:$0xff pattern:$0xb3a29180]
  %263 = vrot.lane.b32.xlu0 %v262, 112
  %v264 = vpop.permute.xlu0 %263
  %vm265 = vcmask 130048
  %s266 = scalar_lea.vmem %s1, 321
  %267 = vst.msk [vmem:[%s266] ss:$8 sm:$0xf] %vm265, %v264
  %s268 = scalar_lea.vmem %s1, 321
  %269 = vst.msk [vmem:[%s268] ss:$8 sm:$0xf0] %vm265, %v264
  %s270 = scalar_lea.vmem %s0, 48
  %v271 = vld.sshfl [vmem:[%s270] sm:$0xff pattern:$0xb3a29180]
  %272 = vrot.lane.b32.xlu0 %v271, 112
  %v273 = vpop.permute.xlu0 %272
  %vm274 = vcmask 130048
  %s275 = scalar_lea.vmem %s1, 385
  %276 = vst.msk [vmem:[%s275] ss:$8 sm:$0xf] %vm274, %v273
  %s277 = scalar_lea.vmem %s1, 385
  %278 = vst.msk [vmem:[%s277] ss:$8 sm:$0xf0] %vm274, %v273
  %s279 = scalar_lea.vmem %s0, 52
  %v280 = vld.sshfl [vmem:[%s279] sm:$0xff pattern:$0xb3a29180]
  %281 = vrot.lane.b32.xlu0 %v280, 112
  %v282 = vpop.permute.xlu0 %281
  %vm283 = vcmask 130048
  %s284 = scalar_lea.vmem %s1, 449
  %285 = vst.msk [vmem:[%s284] ss:$8 sm:$0xf] %vm283, %v282
  %s286 = scalar_lea.vmem %s1, 449
  %287 = vst.msk [vmem:[%s286] ss:$8 sm:$0xf0] %vm283, %v282
  %s288 = scalar_lea.vmem %s0, 64
  %v289 = vld.sshfl [vmem:[%s288] sm:$0xff pattern:$0xb3a29180]
  %290 = vrot.lane.b32.xlu0 %v289, 112
  %v291 = vpop.permute.xlu0 %290
  %vm292 = vcmask 130048
  %s293 = scalar_lea.vmem %s1, 513
  %294 = vst.msk [vmem:[%s293] ss:$8 sm:$0xf] %vm292, %v291
  %s295 = scalar_lea.vmem %s1, 513
  %296 = vst.msk [vmem:[%s295] ss:$8 sm:$0xf0] %vm292, %v291
  %s297 = scalar_lea.vmem %s0, 68
  %v298 = vld.sshfl [vmem:[%s297] sm:$0xff pattern:$0xb3a29180]
  %299 = vrot.lane.b32.xlu0 %v298, 112
  %v300 = vpop.permute.xlu0 %299
  %vm301 = vcmask 130048
  %s302 = scalar_lea.vmem %s1, 577
  %303 = vst.msk [vmem:[%s302] ss:$8 sm:$0xf] %vm301, %v300
  %s304 = scalar_lea.vmem %s1, 577
  %305 = vst.msk [vmem:[%s304] ss:$8 sm:$0xf0] %vm301, %v300
  %s306 = scalar_lea.vmem %s0, 80
  %v307 = vld.sshfl [vmem:[%s306] sm:$0xff pattern:$0xb3a29180]
  %308 = vrot.lane.b32.xlu0 %v307, 112
  %v309 = vpop.permute.xlu0 %308
  %vm310 = vcmask 130048
  %s311 = scalar_lea.vmem %s1, 641
  %312 = vst.msk [vmem:[%s311] ss:$8 sm:$0xf] %vm310, %v309
  %s313 = scalar_lea.vmem %s1, 641
  %314 = vst.msk [vmem:[%s313] ss:$8 sm:$0xf0] %vm310, %v309
  %s315 = scalar_lea.vmem %s0, 84
  %v316 = vld.sshfl [vmem:[%s315] sm:$0xff pattern:$0xb3a29180]
  %317 = vrot.lane.b32.xlu0 %v316, 112
  %v318 = vpop.permute.xlu0 %317
  %vm319 = vcmask 130048
  %s320 = scalar_lea.vmem %s1, 705
  %321 = vst.msk [vmem:[%s320] ss:$8 sm:$0xf] %vm319, %v318
  %s322 = scalar_lea.vmem %s1, 705
  %323 = vst.msk [vmem:[%s322] ss:$8 sm:$0xf0] %vm319, %v318
  %s324 = scalar_lea.vmem %s0, 96
  %v325 = vld.sshfl [vmem:[%s324] sm:$0xff pattern:$0xb3a29180]
  %326 = vrot.lane.b32.xlu0 %v325, 112
  %v327 = vpop.permute.xlu0 %326
  %vm328 = vcmask 130048
  %s329 = scalar_lea.vmem %s1, 769
  %330 = vst.msk [vmem:[%s329] ss:$8 sm:$0xf] %vm328, %v327
  %s331 = scalar_lea.vmem %s1, 769
  %332 = vst.msk [vmem:[%s331] ss:$8 sm:$0xf0] %vm328, %v327
  %s333 = scalar_lea.vmem %s0, 100
  %v334 = vld.sshfl [vmem:[%s333] sm:$0xff pattern:$0xb3a29180]
  %335 = vrot.lane.b32.xlu0 %v334, 112
  %v336 = vpop.permute.xlu0 %335
  %vm337 = vcmask 130048
  %s338 = scalar_lea.vmem %s1, 833
  %339 = vst.msk [vmem:[%s338] ss:$8 sm:$0xf] %vm337, %v336
  %s340 = scalar_lea.vmem %s1, 833
  %341 = vst.msk [vmem:[%s340] ss:$8 sm:$0xf0] %vm337, %v336
  %s342 = scalar_lea.vmem %s0, 112
  %v343 = vld.sshfl [vmem:[%s342] sm:$0xff pattern:$0xb3a29180]
  %344 = vrot.lane.b32.xlu0 %v343, 112
  %v345 = vpop.permute.xlu0 %344
  %vm346 = vcmask 130048
  %s347 = scalar_lea.vmem %s1, 897
  %348 = vst.msk [vmem:[%s347] ss:$8 sm:$0xf] %vm346, %v345
  %s349 = scalar_lea.vmem %s1, 897
  %350 = vst.msk [vmem:[%s349] ss:$8 sm:$0xf0] %vm346, %v345
  %s351 = scalar_lea.vmem %s0, 116
  %v352 = vld.sshfl [vmem:[%s351] sm:$0xff pattern:$0xb3a29180]
  %353 = vrot.lane.b32.xlu0 %v352, 112
  %v354 = vpop.permute.xlu0 %353
  %vm355 = vcmask 130048
  %s356 = scalar_lea.vmem %s1, 961
  %357 = vst.msk [vmem:[%s356] ss:$8 sm:$0xf] %vm355, %v354
  %s358 = scalar_lea.vmem %s1, 961
  %359 = vst.msk [vmem:[%s358] ss:$8 sm:$0xf0] %vm355, %v354
  %s360 = scalar_lea.vmem %s0, 128
  %v361 = vld.sshfl [vmem:[%s360] sm:$0xff pattern:$0xb3a29180]
  %362 = vrot.lane.b32.xlu0 %v361, 112
  %v363 = vpop.permute.xlu0 %362
  %vm364 = vcmask 130048
  %s365 = scalar_lea.vmem %s1, 1025
  %366 = vst.msk [vmem:[%s365] ss:$8 sm:$0xf] %vm364, %v363
  %s367 = scalar_lea.vmem %s1, 1025
  %368 = vst.msk [vmem:[%s367] ss:$8 sm:$0xf0] %vm364, %v363
  %s369 = scalar_lea.vmem %s0, 132
  %v370 = vld.sshfl [vmem:[%s369] sm:$0xff pattern:$0xb3a29180]
  %371 = vrot.lane.b32.xlu0 %v370, 112
  %v372 = vpop.permute.xlu0 %371
  %vm373 = vcmask 130048
  %s374 = scalar_lea.vmem %s1, 1089
  %375 = vst.msk [vmem:[%s374] ss:$8 sm:$0xf] %vm373, %v372
  %s376 = scalar_lea.vmem %s1, 1089
  %377 = vst.msk [vmem:[%s376] ss:$8 sm:$0xf0] %vm373, %v372
  %s378 = scalar_lea.vmem %s0, 144
  %v379 = vld.sshfl [vmem:[%s378] sm:$0xff pattern:$0xb3a29180]
  %380 = vrot.lane.b32.xlu0 %v379, 112
  %v381 = vpop.permute.xlu0 %380
  %vm382 = vcmask 130048
  %s383 = scalar_lea.vmem %s1, 1153
  %384 = vst.msk [vmem:[%s383] ss:$8 sm:$0xf] %vm382, %v381
  %s385 = scalar_lea.vmem %s1, 1153
  %386 = vst.msk [vmem:[%s385] ss:$8 sm:$0xf0] %vm382, %v381
  %s387 = scalar_lea.vmem %s0, 148
  %v388 = vld.sshfl [vmem:[%s387] sm:$0xff pattern:$0xb3a29180]
  %389 = vrot.lane.b32.xlu0 %v388, 112
  %v390 = vpop.permute.xlu0 %389
  %vm391 = vcmask 130048
  %s392 = scalar_lea.vmem %s1, 1217
  %393 = vst.msk [vmem:[%s392] ss:$8 sm:$0xf] %vm391, %v390
  %s394 = scalar_lea.vmem %s1, 1217
  %395 = vst.msk [vmem:[%s394] ss:$8 sm:$0xf0] %vm391, %v390
  %v396 = vld.sshfl [vmem:[%s0] sm:$0xff pattern:$0xb3a29180]
  %397 = vrot.lane.b32.xlu0 %v396, 96
  %v398 = vpop.permute.xlu0 %397
  %vm399 = vcmask 130048
  %s400 = scalar_lea.vmem %s1, 2
  %401 = vst.msk [vmem:[%s400] ss:$8 sm:$0xf] %vm399, %v398
  %s402 = scalar_lea.vmem %s1, 2
  %403 = vst.msk [vmem:[%s402] ss:$8 sm:$0xf0] %vm399, %v398
  %s404 = scalar_lea.vmem %s0, 4
  %v405 = vld.sshfl [vmem:[%s404] sm:$0xff pattern:$0xb3a29180]
  %406 = vrot.lane.b32.xlu0 %v405, 96
  %v407 = vpop.permute.xlu0 %406
  %vm408 = vcmask 130048
  %s409 = scalar_lea.vmem %s1, 66
  %410 = vst.msk [vmem:[%s409] ss:$8 sm:$0xf] %vm408, %v407
  %s411 = scalar_lea.vmem %s1, 66
  %412 = vst.msk [vmem:[%s411] ss:$8 sm:$0xf0] %vm408, %v407
  %s413 = scalar_lea.vmem %s0, 16
  %v414 = vld.sshfl [vmem:[%s413] sm:$0xff pattern:$0xb3a29180]
  %415 = vrot.lane.b32.xlu0 %v414, 96
  %v416 = vpop.permute.xlu0 %415
  %vm417 = vcmask 130048
  %s418 = scalar_lea.vmem %s1, 130
  %419 = vst.msk [vmem:[%s418] ss:$8 sm:$0xf] %vm417, %v416
  %s420 = scalar_lea.vmem %s1, 130
  %421 = vst.msk [vmem:[%s420] ss:$8 sm:$0xf0] %vm417, %v416
  %s422 = scalar_lea.vmem %s0, 20
  %v423 = vld.sshfl [vmem:[%s422] sm:$0xff pattern:$0xb3a29180]
  %424 = vrot.lane.b32.xlu0 %v423, 96
  %v425 = vpop.permute.xlu0 %424
  %vm426 = vcmask 130048
  %s427 = scalar_lea.vmem %s1, 194
  %428 = vst.msk [vmem:[%s427] ss:$8 sm:$0xf] %vm426, %v425
  %s429 = scalar_lea.vmem %s1, 194
  %430 = vst.msk [vmem:[%s429] ss:$8 sm:$0xf0] %vm426, %v425
  %s431 = scalar_lea.vmem %s0, 32
  %v432 = vld.sshfl [vmem:[%s431] sm:$0xff pattern:$0xb3a29180]
  %433 = vrot.lane.b32.xlu0 %v432, 96
  %v434 = vpop.permute.xlu0 %433
  %vm435 = vcmask 130048
  %s436 = scalar_lea.vmem %s1, 258
  %437 = vst.msk [vmem:[%s436] ss:$8 sm:$0xf] %vm435, %v434
  %s438 = scalar_lea.vmem %s1, 258
  %439 = vst.msk [vmem:[%s438] ss:$8 sm:$0xf0] %vm435, %v434
  %s440 = scalar_lea.vmem %s0, 36
  %v441 = vld.sshfl [vmem:[%s440] sm:$0xff pattern:$0xb3a29180]
  %442 = vrot.lane.b32.xlu0 %v441, 96
  %v443 = vpop.permute.xlu0 %442
  %vm444 = vcmask 130048
  %s445 = scalar_lea.vmem %s1, 322
  %446 = vst.msk [vmem:[%s445] ss:$8 sm:$0xf] %vm444, %v443
  %s447 = scalar_lea.vmem %s1, 322
  %448 = vst.msk [vmem:[%s447] ss:$8 sm:$0xf0] %vm444, %v443
  %s449 = scalar_lea.vmem %s0, 48
  %v450 = vld.sshfl [vmem:[%s449] sm:$0xff pattern:$0xb3a29180]
  %451 = vrot.lane.b32.xlu0 %v450, 96
  %v452 = vpop.permute.xlu0 %451
  %vm453 = vcmask 130048
  %s454 = scalar_lea.vmem %s1, 386
  %455 = vst.msk [vmem:[%s454] ss:$8 sm:$0xf] %vm453, %v452
  %s456 = scalar_lea.vmem %s1, 386
  %457 = vst.msk [vmem:[%s456] ss:$8 sm:$0xf0] %vm453, %v452
  %s458 = scalar_lea.vmem %s0, 52
  %v459 = vld.sshfl [vmem:[%s458] sm:$0xff pattern:$0xb3a29180]
  %460 = vrot.lane.b32.xlu0 %v459, 96
  %v461 = vpop.permute.xlu0 %460
  %vm462 = vcmask 130048
  %s463 = scalar_lea.vmem %s1, 450
  %464 = vst.msk [vmem:[%s463] ss:$8 sm:$0xf] %vm462, %v461
  %s465 = scalar_lea.vmem %s1, 450
  %466 = vst.msk [vmem:[%s465] ss:$8 sm:$0xf0] %vm462, %v461
  %s467 = scalar_lea.vmem %s0, 64
  %v468 = vld.sshfl [vmem:[%s467] sm:$0xff pattern:$0xb3a29180]
  %469 = vrot.lane.b32.xlu0 %v468, 96
  %v470 = vpop.permute.xlu0 %469
  %vm471 = vcmask 130048
  %s472 = scalar_lea.vmem %s1, 514
  %473 = vst.msk [vmem:[%s472] ss:$8 sm:$0xf] %vm471, %v470
  %s474 = scalar_lea.vmem %s1, 514
  %475 = vst.msk [vmem:[%s474] ss:$8 sm:$0xf0] %vm471, %v470
  %s476 = scalar_lea.vmem %s0, 68
  %v477 = vld.sshfl [vmem:[%s476] sm:$0xff pattern:$0xb3a29180]
  %478 = vrot.lane.b32.xlu0 %v477, 96
  %v479 = vpop.permute.xlu0 %478
  %vm480 = vcmask 130048
  %s481 = scalar_lea.vmem %s1, 578
  %482 = vst.msk [vmem:[%s481] ss:$8 sm:$0xf] %vm480, %v479
  %s483 = scalar_lea.vmem %s1, 578
  %484 = vst.msk [vmem:[%s483] ss:$8 sm:$0xf0] %vm480, %v479
  %s485 = scalar_lea.vmem %s0, 80
  %v486 = vld.sshfl [vmem:[%s485] sm:$0xff pattern:$0xb3a29180]
  %487 = vrot.lane.b32.xlu0 %v486, 96
  %v488 = vpop.permute.xlu0 %487
  %vm489 = vcmask 130048
  %s490 = scalar_lea.vmem %s1, 642
  %491 = vst.msk [vmem:[%s490] ss:$8 sm:$0xf] %vm489, %v488
  %s492 = scalar_lea.vmem %s1, 642
  %493 = vst.msk [vmem:[%s492] ss:$8 sm:$0xf0] %vm489, %v488
  %s494 = scalar_lea.vmem %s0, 84
  %v495 = vld.sshfl [vmem:[%s494] sm:$0xff pattern:$0xb3a29180]
  %496 = vrot.lane.b32.xlu0 %v495, 96
  %v497 = vpop.permute.xlu0 %496
  %vm498 = vcmask 130048
  %s499 = scalar_lea.vmem %s1, 706
  %500 = vst.msk [vmem:[%s499] ss:$8 sm:$0xf] %vm498, %v497
  %s501 = scalar_lea.vmem %s1, 706
  %502 = vst.msk [vmem:[%s501] ss:$8 sm:$0xf0] %vm498, %v497
  %s503 = scalar_lea.vmem %s0, 96
  %v504 = vld.sshfl [vmem:[%s503] sm:$0xff pattern:$0xb3a29180]
  %505 = vrot.lane.b32.xlu0 %v504, 96
  %v506 = vpop.permute.xlu0 %505
  %vm507 = vcmask 130048
  %s508 = scalar_lea.vmem %s1, 770
  %509 = vst.msk [vmem:[%s508] ss:$8 sm:$0xf] %vm507, %v506
  %s510 = scalar_lea.vmem %s1, 770
  %511 = vst.msk [vmem:[%s510] ss:$8 sm:$0xf0] %vm507, %v506
  %s512 = scalar_lea.vmem %s0, 100
  %v513 = vld.sshfl [vmem:[%s512] sm:$0xff pattern:$0xb3a29180]
  %514 = vrot.lane.b32.xlu0 %v513, 96
  %v515 = vpop.permute.xlu0 %514
  %vm516 = vcmask 130048
  %s517 = scalar_lea.vmem %s1, 834
  %518 = vst.msk [vmem:[%s517] ss:$8 sm:$0xf] %vm516, %v515
  %s519 = scalar_lea.vmem %s1, 834
  %520 = vst.msk [vmem:[%s519] ss:$8 sm:$0xf0] %vm516, %v515
  %s521 = scalar_lea.vmem %s0, 112
  %v522 = vld.sshfl [vmem:[%s521] sm:$0xff pattern:$0xb3a29180]
  %523 = vrot.lane.b32.xlu0 %v522, 96
  %v524 = vpop.permute.xlu0 %523
  %vm525 = vcmask 130048
  %s526 = scalar_lea.vmem %s1, 898
  %527 = vst.msk [vmem:[%s526] ss:$8 sm:$0xf] %vm525, %v524
  %s528 = scalar_lea.vmem %s1, 898
  %529 = vst.msk [vmem:[%s528] ss:$8 sm:$0xf0] %vm525, %v524
  %s530 = scalar_lea.vmem %s0, 116
  %v531 = vld.sshfl [vmem:[%s530] sm:$0xff pattern:$0xb3a29180]
  %532 = vrot.lane.b32.xlu0 %v531, 96
  %v533 = vpop.permute.xlu0 %532
  %vm534 = vcmask 130048
  %s535 = scalar_lea.vmem %s1, 962
  %536 = vst.msk [vmem:[%s535] ss:$8 sm:$0xf] %vm534, %v533
  %s537 = scalar_lea.vmem %s1, 962
  %538 = vst.msk [vmem:[%s537] ss:$8 sm:$0xf0] %vm534, %v533
  %s539 = scalar_lea.vmem %s0, 128
  %v540 = vld.sshfl [vmem:[%s539] sm:$0xff pattern:$0xb3a29180]
  %541 = vrot.lane.b32.xlu0 %v540, 96
  %v542 = vpop.permute.xlu0 %541
  %vm543 = vcmask 130048
  %s544 = scalar_lea.vmem %s1, 1026
  %545 = vst.msk [vmem:[%s544] ss:$8 sm:$0xf] %vm543, %v542
  %s546 = scalar_lea.vmem %s1, 1026
  %547 = vst.msk [vmem:[%s546] ss:$8 sm:$0xf0] %vm543, %v542
  %s548 = scalar_lea.vmem %s0, 132
  %v549 = vld.sshfl [vmem:[%s548] sm:$0xff pattern:$0xb3a29180]
  %550 = vrot.lane.b32.xlu0 %v549, 96
  %v551 = vpop.permute.xlu0 %550
  %vm552 = vcmask 130048
  %s553 = scalar_lea.vmem %s1, 1090
  %554 = vst.msk [vmem:[%s553] ss:$8 sm:$0xf] %vm552, %v551
  %s555 = scalar_lea.vmem %s1, 1090
  %556 = vst.msk [vmem:[%s555] ss:$8 sm:$0xf0] %vm552, %v551
  %s557 = scalar_lea.vmem %s0, 144
  %v558 = vld.sshfl [vmem:[%s557] sm:$0xff pattern:$0xb3a29180]
  %559 = vrot.lane.b32.xlu0 %v558, 96
  %v560 = vpop.permute.xlu0 %559
  %vm561 = vcmask 130048
  %s562 = scalar_lea.vmem %s1, 1154
  %563 = vst.msk [vmem:[%s562] ss:$8 sm:$0xf] %vm561, %v560
  %s564 = scalar_lea.vmem %s1, 1154
  %565 = vst.msk [vmem:[%s564] ss:$8 sm:$0xf0] %vm561, %v560
  %s566 = scalar_lea.vmem %s0, 148
  %v567 = vld.sshfl [vmem:[%s566] sm:$0xff pattern:$0xb3a29180]
  %568 = vrot.lane.b32.xlu0 %v567, 96
  %v569 = vpop.permute.xlu0 %568
  %vm570 = vcmask 130048
  %s571 = scalar_lea.vmem %s1, 1218
  %572 = vst.msk [vmem:[%s571] ss:$8 sm:$0xf] %vm570, %v569
  %s573 = scalar_lea.vmem %s1, 1218
  %574 = vst.msk [vmem:[%s573] ss:$8 sm:$0xf0] %vm570, %v569
  %v575 = vld.sshfl [vmem:[%s0] sm:$0xff pattern:$0xb3a29180]
  %576 = vrot.lane.b32.xlu0 %v575, 80
  %v577 = vpop.permute.xlu0 %576
  %vm578 = vcmask 130048
  %s579 = scalar_lea.vmem %s1, 3
  %580 = vst.msk [vmem:[%s579] ss:$8 sm:$0xf] %vm578, %v577
  %s581 = scalar_lea.vmem %s1, 3
  %582 = vst.msk [vmem:[%s581] ss:$8 sm:$0xf0] %vm578, %v577
  %s583 = scalar_lea.vmem %s0, 4
  %v584 = vld.sshfl [vmem:[%s583] sm:$0xff pattern:$0xb3a29180]
  %585 = vrot.lane.b32.xlu0 %v584, 80
  %v586 = vpop.permute.xlu0 %585
  %vm587 = vcmask 130048
  %s588 = scalar_lea.vmem %s1, 67
  %589 = vst.msk [vmem:[%s588] ss:$8 sm:$0xf] %vm587, %v586
  %s590 = scalar_lea.vmem %s1, 67
  %591 = vst.msk [vmem:[%s590] ss:$8 sm:$0xf0] %vm587, %v586
  %s592 = scalar_lea.vmem %s0, 16
  %v593 = vld.sshfl [vmem:[%s592] sm:$0xff pattern:$0xb3a29180]
  %594 = vrot.lane.b32.xlu0 %v593, 80
  %v595 = vpop.permute.xlu0 %594
  %vm596 = vcmask 130048
  %s597 = scalar_lea.vmem %s1, 131
  %598 = vst.msk [vmem:[%s597] ss:$8 sm:$0xf] %vm596, %v595
  %s599 = scalar_lea.vmem %s1, 131
  %600 = vst.msk [vmem:[%s599] ss:$8 sm:$0xf0] %vm596, %v595
  %s601 = scalar_lea.vmem %s0, 20
  %v602 = vld.sshfl [vmem:[%s601] sm:$0xff pattern:$0xb3a29180]
  %603 = vrot.lane.b32.xlu0 %v602, 80
  %v604 = vpop.permute.xlu0 %603
  %vm605 = vcmask 130048
  %s606 = scalar_lea.vmem %s1, 195
  %607 = vst.msk [vmem:[%s606] ss:$8 sm:$0xf] %vm605, %v604
  %s608 = scalar_lea.vmem %s1, 195
  %609 = vst.msk [vmem:[%s608] ss:$8 sm:$0xf0] %vm605, %v604
  %s610 = scalar_lea.vmem %s0, 32
  %v611 = vld.sshfl [vmem:[%s610] sm:$0xff pattern:$0xb3a29180]
  %612 = vrot.lane.b32.xlu0 %v611, 80
  %v613 = vpop.permute.xlu0 %612
  %vm614 = vcmask 130048
  %s615 = scalar_lea.vmem %s1, 259
  %616 = vst.msk [vmem:[%s615] ss:$8 sm:$0xf] %vm614, %v613
  %s617 = scalar_lea.vmem %s1, 259
  %618 = vst.msk [vmem:[%s617] ss:$8 sm:$0xf0] %vm614, %v613
  %s619 = scalar_lea.vmem %s0, 36
  %v620 = vld.sshfl [vmem:[%s619] sm:$0xff pattern:$0xb3a29180]
  %621 = vrot.lane.b32.xlu0 %v620, 80
  %v622 = vpop.permute.xlu0 %621
  %vm623 = vcmask 130048
  %s624 = scalar_lea.vmem %s1, 323
  %625 = vst.msk [vmem:[%s624] ss:$8 sm:$0xf] %vm623, %v622
  %s626 = scalar_lea.vmem %s1, 323
  %627 = vst.msk [vmem:[%s626] ss:$8 sm:$0xf0] %vm623, %v622
  %s628 = scalar_lea.vmem %s0, 48
  %v629 = vld.sshfl [vmem:[%s628] sm:$0xff pattern:$0xb3a29180]
  %630 = vrot.lane.b32.xlu0 %v629, 80
  %v631 = vpop.permute.xlu0 %630
  %vm632 = vcmask 130048
  %s633 = scalar_lea.vmem %s1, 387
  %634 = vst.msk [vmem:[%s633] ss:$8 sm:$0xf] %vm632, %v631
  %s635 = scalar_lea.vmem %s1, 387
  %636 = vst.msk [vmem:[%s635] ss:$8 sm:$0xf0] %vm632, %v631
  %s637 = scalar_lea.vmem %s0, 52
  %v638 = vld.sshfl [vmem:[%s637] sm:$0xff pattern:$0xb3a29180]
  %639 = vrot.lane.b32.xlu0 %v638, 80
  %v640 = vpop.permute.xlu0 %639
  %vm641 = vcmask 130048
  %s642 = scalar_lea.vmem %s1, 451
  %643 = vst.msk [vmem:[%s642] ss:$8 sm:$0xf] %vm641, %v640
  %s644 = scalar_lea.vmem %s1, 451
  %645 = vst.msk [vmem:[%s644] ss:$8 sm:$0xf0] %vm641, %v640
  %s646 = scalar_lea.vmem %s0, 64
  %v647 = vld.sshfl [vmem:[%s646] sm:$0xff pattern:$0xb3a29180]
  %648 = vrot.lane.b32.xlu0 %v647, 80
  %v649 = vpop.permute.xlu0 %648
  %vm650 = vcmask 130048
  %s651 = scalar_lea.vmem %s1, 515
  %652 = vst.msk [vmem:[%s651] ss:$8 sm:$0xf] %vm650, %v649
  %s653 = scalar_lea.vmem %s1, 515
  %654 = vst.msk [vmem:[%s653] ss:$8 sm:$0xf0] %vm650, %v649
  %s655 = scalar_lea.vmem %s0, 68
  %v656 = vld.sshfl [vmem:[%s655] sm:$0xff pattern:$0xb3a29180]
  %657 = vrot.lane.b32.xlu0 %v656, 80
  %v658 = vpop.permute.xlu0 %657
  %vm659 = vcmask 130048
  %s660 = scalar_lea.vmem %s1, 579
  %661 = vst.msk [vmem:[%s660] ss:$8 sm:$0xf] %vm659, %v658
  %s662 = scalar_lea.vmem %s1, 579
  %663 = vst.msk [vmem:[%s662] ss:$8 sm:$0xf0] %vm659, %v658
  %s664 = scalar_lea.vmem %s0, 80
  %v665 = vld.sshfl [vmem:[%s664] sm:$0xff pattern:$0xb3a29180]
  %666 = vrot.lane.b32.xlu0 %v665, 80
  %v667 = vpop.permute.xlu0 %666
  %vm668 = vcmask 130048
  %s669 = scalar_lea.vmem %s1, 643
  %670 = vst.msk [vmem:[%s669] ss:$8 sm:$0xf] %vm668, %v667
  %s671 = scalar_lea.vmem %s1, 643
  %672 = vst.msk [vmem:[%s671] ss:$8 sm:$0xf0] %vm668, %v667
  %s673 = scalar_lea.vmem %s0, 84
  %v674 = vld.sshfl [vmem:[%s673] sm:$0xff pattern:$0xb3a29180]
  %675 = vrot.lane.b32.xlu0 %v674, 80
  %v676 = vpop.permute.xlu0 %675
  %vm677 = vcmask 130048
  %s678 = scalar_lea.vmem %s1, 707
  %679 = vst.msk [vmem:[%s678] ss:$8 sm:$0xf] %vm677, %v676
  %s680 = scalar_lea.vmem %s1, 707
  %681 = vst.msk [vmem:[%s680] ss:$8 sm:$0xf0] %vm677, %v676
  %s682 = scalar_lea.vmem %s0, 96
  %v683 = vld.sshfl [vmem:[%s682] sm:$0xff pattern:$0xb3a29180]
  %684 = vrot.lane.b32.xlu0 %v683, 80
  %v685 = vpop.permute.xlu0 %684
  %vm686 = vcmask 130048
  %s687 = scalar_lea.vmem %s1, 771
  %688 = vst.msk [vmem:[%s687] ss:$8 sm:$0xf] %vm686, %v685
  %s689 = scalar_lea.vmem %s1, 771
  %690 = vst.msk [vmem:[%s689] ss:$8 sm:$0xf0] %vm686, %v685
  %s691 = scalar_lea.vmem %s0, 100
  %v692 = vld.sshfl [vmem:[%s691] sm:$0xff pattern:$0xb3a29180]
  %693 = vrot.lane.b32.xlu0 %v692, 80
  %v694 = vpop.permute.xlu0 %693
  %vm695 = vcmask 130048
  %s696 = scalar_lea.vmem %s1, 835
  %697 = vst.msk [vmem:[%s696] ss:$8 sm:$0xf] %vm695, %v694
  %s698 = scalar_lea.vmem %s1, 835
  %699 = vst.msk [vmem:[%s698] ss:$8 sm:$0xf0] %vm695, %v694
  %s700 = scalar_lea.vmem %s0, 112
  %v701 = vld.sshfl [vmem:[%s700] sm:$0xff pattern:$0xb3a29180]
  %702 = vrot.lane.b32.xlu0 %v701, 80
  %v703 = vpop.permute.xlu0 %702
  %vm704 = vcmask 130048
  %s705 = scalar_lea.vmem %s1, 899
  %706 = vst.msk [vmem:[%s705] ss:$8 sm:$0xf] %vm704, %v703
  %s707 = scalar_lea.vmem %s1, 899
  %708 = vst.msk [vmem:[%s707] ss:$8 sm:$0xf0] %vm704, %v703
  %s709 = scalar_lea.vmem %s0, 116
  %v710 = vld.sshfl [vmem:[%s709] sm:$0xff pattern:$0xb3a29180]
  %711 = vrot.lane.b32.xlu0 %v710, 80
  %v712 = vpop.permute.xlu0 %711
  %vm713 = vcmask 130048
  %s714 = scalar_lea.vmem %s1, 963
  %715 = vst.msk [vmem:[%s714] ss:$8 sm:$0xf] %vm713, %v712
  %s716 = scalar_lea.vmem %s1, 963
  %717 = vst.msk [vmem:[%s716] ss:$8 sm:$0xf0] %vm713, %v712
  %s718 = scalar_lea.vmem %s0, 128
  %v719 = vld.sshfl [vmem:[%s718] sm:$0xff pattern:$0xb3a29180]
  %720 = vrot.lane.b32.xlu0 %v719, 80
  %v721 = vpop.permute.xlu0 %720
  %vm722 = vcmask 130048
  %s723 = scalar_lea.vmem %s1, 1027
  %724 = vst.msk [vmem:[%s723] ss:$8 sm:$0xf] %vm722, %v721
  %s725 = scalar_lea.vmem %s1, 1027
  %726 = vst.msk [vmem:[%s725] ss:$8 sm:$0xf0] %vm722, %v721
  %s727 = scalar_lea.vmem %s0, 132
  %v728 = vld.sshfl [vmem:[%s727] sm:$0xff pattern:$0xb3a29180]
  %729 = vrot.lane.b32.xlu0 %v728, 80
  %v730 = vpop.permute.xlu0 %729
  %vm731 = vcmask 130048
  %s732 = scalar_lea.vmem %s1, 1091
  %733 = vst.msk [vmem:[%s732] ss:$8 sm:$0xf] %vm731, %v730
  %s734 = scalar_lea.vmem %s1, 1091
  %735 = vst.msk [vmem:[%s734] ss:$8 sm:$0xf0] %vm731, %v730
  %s736 = scalar_lea.vmem %s0, 144
  %v737 = vld.sshfl [vmem:[%s736] sm:$0xff pattern:$0xb3a29180]
  %738 = vrot.lane.b32.xlu0 %v737, 80
  %v739 = vpop.permute.xlu0 %738
  %vm740 = vcmask 130048
  %s741 = scalar_lea.vmem %s1, 1155
  %742 = vst.msk [vmem:[%s741] ss:$8 sm:$0xf] %vm740, %v739
  %s743 = scalar_lea.vmem %s1, 1155
  %744 = vst.msk [vmem:[%s743] ss:$8 sm:$0xf0] %vm740, %v739
  %s745 = scalar_lea.vmem %s0, 148
  %v746 = vld.sshfl [vmem:[%s745] sm:$0xff pattern:$0xb3a29180]
  %747 = vrot.lane.b32.xlu0 %v746, 80
  %v748 = vpop.permute.xlu0 %747
  %vm749 = vcmask 130048
  %s750 = scalar_lea.vmem %s1, 1219
  %751 = vst.msk [vmem:[%s750] ss:$8 sm:$0xf] %vm749, %v748
  %s752 = scalar_lea.vmem %s1, 1219
  %753 = vst.msk [vmem:[%s752] ss:$8 sm:$0xf0] %vm749, %v748
  %v754 = vld.sshfl [vmem:[%s0] sm:$0xff pattern:$0xb3a29180]
  %755 = vrot.lane.b32.xlu0 %v754, 64
  %v756 = vpop.permute.xlu0 %755
  %vm757 = vcmask 130048
  %s758 = scalar_lea.vmem %s1, 4
  %759 = vst.msk [vmem:[%s758] ss:$8 sm:$0xf] %vm757, %v756
  %s760 = scalar_lea.vmem %s1, 4
  %761 = vst.msk [vmem:[%s760] ss:$8 sm:$0xf0] %vm757, %v756
  %s762 = scalar_lea.vmem %s0, 4
  %v763 = vld.sshfl [vmem:[%s762] sm:$0xff pattern:$0xb3a29180]
  %764 = vrot.lane.b32.xlu0 %v763, 64
  %v765 = vpop.permute.xlu0 %764
  %vm766 = vcmask 130048
  %s767 = scalar_lea.vmem %s1, 68
  %768 = vst.msk [vmem:[%s767] ss:$8 sm:$0xf] %vm766, %v765
  %s769 = scalar_lea.vmem %s1, 68
  %770 = vst.msk [vmem:[%s769] ss:$8 sm:$0xf0] %vm766, %v765
  %s771 = scalar_lea.vmem %s0, 16
  %v772 = vld.sshfl [vmem:[%s771] sm:$0xff pattern:$0xb3a29180]
  %773 = vrot.lane.b32.xlu0 %v772, 64
  %v774 = vpop.permute.xlu0 %773
  %vm775 = vcmask 130048
  %s776 = scalar_lea.vmem %s1, 132
  %777 = vst.msk [vmem:[%s776] ss:$8 sm:$0xf] %vm775, %v774
  %s778 = scalar_lea.vmem %s1, 132
  %779 = vst.msk [vmem:[%s778] ss:$8 sm:$0xf0] %vm775, %v774
  %s780 = scalar_lea.vmem %s0, 20
  %v781 = vld.sshfl [vmem:[%s780] sm:$0xff pattern:$0xb3a29180]
  %782 = vrot.lane.b32.xlu0 %v781, 64
  %v783 = vpop.permute.xlu0 %782
  %vm784 = vcmask 130048
  %s785 = scalar_lea.vmem %s1, 196
  %786 = vst.msk [vmem:[%s785] ss:$8 sm:$0xf] %vm784, %v783
  %s787 = scalar_lea.vmem %s1, 196
  %788 = vst.msk [vmem:[%s787] ss:$8 sm:$0xf0] %vm784, %v783
  %s789 = scalar_lea.vmem %s0, 32
  %v790 = vld.sshfl [vmem:[%s789] sm:$0xff pattern:$0xb3a29180]
  %791 = vrot.lane.b32.xlu0 %v790, 64
  %v792 = vpop.permute.xlu0 %791
  %vm793 = vcmask 130048
  %s794 = scalar_lea.vmem %s1, 260
  %795 = vst.msk [vmem:[%s794] ss:$8 sm:$0xf] %vm793, %v792
  %s796 = scalar_lea.vmem %s1, 260
  %797 = vst.msk [vmem:[%s796] ss:$8 sm:$0xf0] %vm793, %v792
  %s798 = scalar_lea.vmem %s0, 36
  %v799 = vld.sshfl [vmem:[%s798] sm:$0xff pattern:$0xb3a29180]
  %800 = vrot.lane.b32.xlu0 %v799, 64
  %v801 = vpop.permute.xlu0 %800
  %vm802 = vcmask 130048
  %s803 = scalar_lea.vmem %s1, 324
  %804 = vst.msk [vmem:[%s803] ss:$8 sm:$0xf] %vm802, %v801
  %s805 = scalar_lea.vmem %s1, 324
  %806 = vst.msk [vmem:[%s805] ss:$8 sm:$0xf0] %vm802, %v801
  %s807 = scalar_lea.vmem %s0, 48
  %v808 = vld.sshfl [vmem:[%s807] sm:$0xff pattern:$0xb3a29180]
  %809 = vrot.lane.b32.xlu0 %v808, 64
  %v810 = vpop.permute.xlu0 %809
  %vm811 = vcmask 130048
  %s812 = scalar_lea.vmem %s1, 388
  %813 = vst.msk [vmem:[%s812] ss:$8 sm:$0xf] %vm811, %v810
  %s814 = scalar_lea.vmem %s1, 388
  %815 = vst.msk [vmem:[%s814] ss:$8 sm:$0xf0] %vm811, %v810
  %s816 = scalar_lea.vmem %s0, 52
  %v817 = vld.sshfl [vmem:[%s816] sm:$0xff pattern:$0xb3a29180]
  %818 = vrot.lane.b32.xlu0 %v817, 64
  %v819 = vpop.permute.xlu0 %818
  %vm820 = vcmask 130048
  %s821 = scalar_lea.vmem %s1, 452
  %822 = vst.msk [vmem:[%s821] ss:$8 sm:$0xf] %vm820, %v819
  %s823 = scalar_lea.vmem %s1, 452
  %824 = vst.msk [vmem:[%s823] ss:$8 sm:$0xf0] %vm820, %v819
  %s825 = scalar_lea.vmem %s0, 64
  %v826 = vld.sshfl [vmem:[%s825] sm:$0xff pattern:$0xb3a29180]
  %827 = vrot.lane.b32.xlu0 %v826, 64
  %v828 = vpop.permute.xlu0 %827
  %vm829 = vcmask 130048
  %s830 = scalar_lea.vmem %s1, 516
  %831 = vst.msk [vmem:[%s830] ss:$8 sm:$0xf] %vm829, %v828
  %s832 = scalar_lea.vmem %s1, 516
  %833 = vst.msk [vmem:[%s832] ss:$8 sm:$0xf0] %vm829, %v828
  %s834 = scalar_lea.vmem %s0, 68
  %v835 = vld.sshfl [vmem:[%s834] sm:$0xff pattern:$0xb3a29180]
  %836 = vrot.lane.b32.xlu0 %v835, 64
  %v837 = vpop.permute.xlu0 %836
  %vm838 = vcmask 130048
  %s839 = scalar_lea.vmem %s1, 580
  %840 = vst.msk [vmem:[%s839] ss:$8 sm:$0xf] %vm838, %v837
  %s841 = scalar_lea.vmem %s1, 580
  %842 = vst.msk [vmem:[%s841] ss:$8 sm:$0xf0] %vm838, %v837
  %s843 = scalar_lea.vmem %s0, 80
  %v844 = vld.sshfl [vmem:[%s843] sm:$0xff pattern:$0xb3a29180]
  %845 = vrot.lane.b32.xlu0 %v844, 64
  %v846 = vpop.permute.xlu0 %845
  %vm847 = vcmask 130048
  %s848 = scalar_lea.vmem %s1, 644
  %849 = vst.msk [vmem:[%s848] ss:$8 sm:$0xf] %vm847, %v846
  %s850 = scalar_lea.vmem %s1, 644
  %851 = vst.msk [vmem:[%s850] ss:$8 sm:$0xf0] %vm847, %v846
  %s852 = scalar_lea.vmem %s0, 84
  %v853 = vld.sshfl [vmem:[%s852] sm:$0xff pattern:$0xb3a29180]
  %854 = vrot.lane.b32.xlu0 %v853, 64
  %v855 = vpop.permute.xlu0 %854
  %vm856 = vcmask 130048
  %s857 = scalar_lea.vmem %s1, 708
  %858 = vst.msk [vmem:[%s857] ss:$8 sm:$0xf] %vm856, %v855
  %s859 = scalar_lea.vmem %s1, 708
  %860 = vst.msk [vmem:[%s859] ss:$8 sm:$0xf0] %vm856, %v855
  %s861 = scalar_lea.vmem %s0, 96
  %v862 = vld.sshfl [vmem:[%s861] sm:$0xff pattern:$0xb3a29180]
  %863 = vrot.lane.b32.xlu0 %v862, 64
  %v864 = vpop.permute.xlu0 %863
  %vm865 = vcmask 130048
  %s866 = scalar_lea.vmem %s1, 772
  %867 = vst.msk [vmem:[%s866] ss:$8 sm:$0xf] %vm865, %v864
  %s868 = scalar_lea.vmem %s1, 772
  %869 = vst.msk [vmem:[%s868] ss:$8 sm:$0xf0] %vm865, %v864
  %s870 = scalar_lea.vmem %s0, 100
  %v871 = vld.sshfl [vmem:[%s870] sm:$0xff pattern:$0xb3a29180]
  %872 = vrot.lane.b32.xlu0 %v871, 64
  %v873 = vpop.permute.xlu0 %872
  %vm874 = vcmask 130048
  %s875 = scalar_lea.vmem %s1, 836
  %876 = vst.msk [vmem:[%s875] ss:$8 sm:$0xf] %vm874, %v873
  %s877 = scalar_lea.vmem %s1, 836
  %878 = vst.msk [vmem:[%s877] ss:$8 sm:$0xf0] %vm874, %v873
  %s879 = scalar_lea.vmem %s0, 112
  %v880 = vld.sshfl [vmem:[%s879] sm:$0xff pattern:$0xb3a29180]
  %881 = vrot.lane.b32.xlu0 %v880, 64
  %v882 = vpop.permute.xlu0 %881
  %vm883 = vcmask 130048
  %s884 = scalar_lea.vmem %s1, 900
  %885 = vst.msk [vmem:[%s884] ss:$8 sm:$0xf] %vm883, %v882
  %s886 = scalar_lea.vmem %s1, 900
  %887 = vst.msk [vmem:[%s886] ss:$8 sm:$0xf0] %vm883, %v882
  %s888 = scalar_lea.vmem %s0, 116
  %v889 = vld.sshfl [vmem:[%s888] sm:$0xff pattern:$0xb3a29180]
  %890 = vrot.lane.b32.xlu0 %v889, 64
  %v891 = vpop.permute.xlu0 %890
  %vm892 = vcmask 130048
  %s893 = scalar_lea.vmem %s1, 964
  %894 = vst.msk [vmem:[%s893] ss:$8 sm:$0xf] %vm892, %v891
  %s895 = scalar_lea.vmem %s1, 964
  %896 = vst.msk [vmem:[%s895] ss:$8 sm:$0xf0] %vm892, %v891
  %s897 = scalar_lea.vmem %s0, 128
  %v898 = vld.sshfl [vmem:[%s897] sm:$0xff pattern:$0xb3a29180]
  %899 = vrot.lane.b32.xlu0 %v898, 64
  %v900 = vpop.permute.xlu0 %899
  %vm901 = vcmask 130048
  %s902 = scalar_lea.vmem %s1, 1028
  %903 = vst.msk [vmem:[%s902] ss:$8 sm:$0xf] %vm901, %v900
  %s904 = scalar_lea.vmem %s1, 1028
  %905 = vst.msk [vmem:[%s904] ss:$8 sm:$0xf0] %vm901, %v900
  %s906 = scalar_lea.vmem %s0, 132
  %v907 = vld.sshfl [vmem:[%s906] sm:$0xff pattern:$0xb3a29180]
  %908 = vrot.lane.b32.xlu0 %v907, 64
  %v909 = vpop.permute.xlu0 %908
  %vm910 = vcmask 130048
  %s911 = scalar_lea.vmem %s1, 1092
  %912 = vst.msk [vmem:[%s911] ss:$8 sm:$0xf] %vm910, %v909
  %s913 = scalar_lea.vmem %s1, 1092
  %914 = vst.msk [vmem:[%s913] ss:$8 sm:$0xf0] %vm910, %v909
  %s915 = scalar_lea.vmem %s0, 144
  %v916 = vld.sshfl [vmem:[%s915] sm:$0xff pattern:$0xb3a29180]
  %917 = vrot.lane.b32.xlu0 %v916, 64
  %v918 = vpop.permute.xlu0 %917
  %vm919 = vcmask 130048
  %s920 = scalar_lea.vmem %s1, 1156
  %921 = vst.msk [vmem:[%s920] ss:$8 sm:$0xf] %vm919, %v918
  %s922 = scalar_lea.vmem %s1, 1156
  %923 = vst.msk [vmem:[%s922] ss:$8 sm:$0xf0] %vm919, %v918
  %s924 = scalar_lea.vmem %s0, 148
  %v925 = vld.sshfl [vmem:[%s924] sm:$0xff pattern:$0xb3a29180]
  %926 = vrot.lane.b32.xlu0 %v925, 64
  %v927 = vpop.permute.xlu0 %926
  %vm928 = vcmask 130048
  %s929 = scalar_lea.vmem %s1, 1220
  %930 = vst.msk [vmem:[%s929] ss:$8 sm:$0xf] %vm928, %v927
  %s931 = scalar_lea.vmem %s1, 1220
  %932 = vst.msk [vmem:[%s931] ss:$8 sm:$0xf0] %vm928, %v927
  %v933 = vld.sshfl [vmem:[%s0] sm:$0xff pattern:$0xb3a29180]
  %934 = vrot.lane.b32.xlu0 %v933, 48
  %v935 = vpop.permute.xlu0 %934
  %vm936 = vcmask 130048
  %s937 = scalar_lea.vmem %s1, 5
  %938 = vst.msk [vmem:[%s937] ss:$8 sm:$0xf] %vm936, %v935
  %s939 = scalar_lea.vmem %s1, 5
  %940 = vst.msk [vmem:[%s939] ss:$8 sm:$0xf0] %vm936, %v935
  %s941 = scalar_lea.vmem %s0, 4
  %v942 = vld.sshfl [vmem:[%s941] sm:$0xff pattern:$0xb3a29180]
  %943 = vrot.lane.b32.xlu0 %v942, 48
  %v944 = vpop.permute.xlu0 %943
  %vm945 = vcmask 130048
  %s946 = scalar_lea.vmem %s1, 69
  %947 = vst.msk [vmem:[%s946] ss:$8 sm:$0xf] %vm945, %v944
  %s948 = scalar_lea.vmem %s1, 69
  %949 = vst.msk [vmem:[%s948] ss:$8 sm:$0xf0] %vm945, %v944
  %s950 = scalar_lea.vmem %s0, 16
  %v951 = vld.sshfl [vmem:[%s950] sm:$0xff pattern:$0xb3a29180]
  %952 = vrot.lane.b32.xlu0 %v951, 48
  %v953 = vpop.permute.xlu0 %952
  %vm954 = vcmask 130048
  %s955 = scalar_lea.vmem %s1, 133
  %956 = vst.msk [vmem:[%s955] ss:$8 sm:$0xf] %vm954, %v953
  %s957 = scalar_lea.vmem %s1, 133
  %958 = vst.msk [vmem:[%s957] ss:$8 sm:$0xf0] %vm954, %v953
  %s959 = scalar_lea.vmem %s0, 20
  %v960 = vld.sshfl [vmem:[%s959] sm:$0xff pattern:$0xb3a29180]
  %961 = vrot.lane.b32.xlu0 %v960, 48
  %v962 = vpop.permute.xlu0 %961
  %vm963 = vcmask 130048
  %s964 = scalar_lea.vmem %s1, 197
  %965 = vst.msk [vmem:[%s964] ss:$8 sm:$0xf] %vm963, %v962
  %s966 = scalar_lea.vmem %s1, 197
  %967 = vst.msk [vmem:[%s966] ss:$8 sm:$0xf0] %vm963, %v962
  %s968 = scalar_lea.vmem %s0, 32
  %v969 = vld.sshfl [vmem:[%s968] sm:$0xff pattern:$0xb3a29180]
  %970 = vrot.lane.b32.xlu0 %v969, 48
  %v971 = vpop.permute.xlu0 %970
  %vm972 = vcmask 130048
  %s973 = scalar_lea.vmem %s1, 261
  %974 = vst.msk [vmem:[%s973] ss:$8 sm:$0xf] %vm972, %v971
  %s975 = scalar_lea.vmem %s1, 261
  %976 = vst.msk [vmem:[%s975] ss:$8 sm:$0xf0] %vm972, %v971
  %s977 = scalar_lea.vmem %s0, 36
  %v978 = vld.sshfl [vmem:[%s977] sm:$0xff pattern:$0xb3a29180]
  %979 = vrot.lane.b32.xlu0 %v978, 48
  %v980 = vpop.permute.xlu0 %979
  %vm981 = vcmask 130048
  %s982 = scalar_lea.vmem %s1, 325
  %983 = vst.msk [vmem:[%s982] ss:$8 sm:$0xf] %vm981, %v980
  %s984 = scalar_lea.vmem %s1, 325
  %985 = vst.msk [vmem:[%s984] ss:$8 sm:$0xf0] %vm981, %v980
  %s986 = scalar_lea.vmem %s0, 48
  %v987 = vld.sshfl [vmem:[%s986] sm:$0xff pattern:$0xb3a29180]
  %988 = vrot.lane.b32.xlu0 %v987, 48
  %v989 = vpop.permute.xlu0 %988
  %vm990 = vcmask 130048
  %s991 = scalar_lea.vmem %s1, 389
  %992 = vst.msk [vmem:[%s991] ss:$8 sm:$0xf] %vm990, %v989
  %s993 = scalar_lea.vmem %s1, 389
  %994 = vst.msk [vmem:[%s993] ss:$8 sm:$0xf0] %vm990, %v989
  %s995 = scalar_lea.vmem %s0, 52
  %v996 = vld.sshfl [vmem:[%s995] sm:$0xff pattern:$0xb3a29180]
  %997 = vrot.lane.b32.xlu0 %v996, 48
  %v998 = vpop.permute.xlu0 %997
  %vm999 = vcmask 130048
  %s1000 = scalar_lea.vmem %s1, 453
  %1001 = vst.msk [vmem:[%s1000] ss:$8 sm:$0xf] %vm999, %v998
  %s1002 = scalar_lea.vmem %s1, 453
  %1003 = vst.msk [vmem:[%s1002] ss:$8 sm:$0xf0] %vm999, %v998
  %s1004 = scalar_lea.vmem %s0, 64
  %v1005 = vld.sshfl [vmem:[%s1004] sm:$0xff pattern:$0xb3a29180]
  %1006 = vrot.lane.b32.xlu0 %v1005, 48
  %v1007 = vpop.permute.xlu0 %1006
  %vm1008 = vcmask 130048
  %s1009 = scalar_lea.vmem %s1, 517
  %1010 = vst.msk [vmem:[%s1009] ss:$8 sm:$0xf] %vm1008, %v1007
  %s1011 = scalar_lea.vmem %s1, 517
  %1012 = vst.msk [vmem:[%s1011] ss:$8 sm:$0xf0] %vm1008, %v1007
  %s1013 = scalar_lea.vmem %s0, 68
  %v1014 = vld.sshfl [vmem:[%s1013] sm:$0xff pattern:$0xb3a29180]
  %1015 = vrot.lane.b32.xlu0 %v1014, 48
  %v1016 = vpop.permute.xlu0 %1015
  %vm1017 = vcmask 130048
  %s1018 = scalar_lea.vmem %s1, 581
  %1019 = vst.msk [vmem:[%s1018] ss:$8 sm:$0xf] %vm1017, %v1016
  %s1020 = scalar_lea.vmem %s1, 581
  %1021 = vst.msk [vmem:[%s1020] ss:$8 sm:$0xf0] %vm1017, %v1016
  %s1022 = scalar_lea.vmem %s0, 80
  %v1023 = vld.sshfl [vmem:[%s1022] sm:$0xff pattern:$0xb3a29180]
  %1024 = vrot.lane.b32.xlu0 %v1023, 48
  %v1025 = vpop.permute.xlu0 %1024
  %vm1026 = vcmask 130048
  %s1027 = scalar_lea.vmem %s1, 645
  %1028 = vst.msk [vmem:[%s1027] ss:$8 sm:$0xf] %vm1026, %v1025
  %s1029 = scalar_lea.vmem %s1, 645
  %1030 = vst.msk [vmem:[%s1029] ss:$8 sm:$0xf0] %vm1026, %v1025
  %s1031 = scalar_lea.vmem %s0, 84
  %v1032 = vld.sshfl [vmem:[%s1031] sm:$0xff pattern:$0xb3a29180]
  %1033 = vrot.lane.b32.xlu0 %v1032, 48
  %v1034 = vpop.permute.xlu0 %1033
  %vm1035 = vcmask 130048
  %s1036 = scalar_lea.vmem %s1, 709
  %1037 = vst.msk [vmem:[%s1036] ss:$8 sm:$0xf] %vm1035, %v1034
  %s1038 = scalar_lea.vmem %s1, 709
  %1039 = vst.msk [vmem:[%s1038] ss:$8 sm:$0xf0] %vm1035, %v1034
  %s1040 = scalar_lea.vmem %s0, 96
  %v1041 = vld.sshfl [vmem:[%s1040] sm:$0xff pattern:$0xb3a29180]
  %1042 = vrot.lane.b32.xlu0 %v1041, 48
  %v1043 = vpop.permute.xlu0 %1042
  %vm1044 = vcmask 130048
  %s1045 = scalar_lea.vmem %s1, 773
  %1046 = vst.msk [vmem:[%s1045] ss:$8 sm:$0xf] %vm1044, %v1043
  %s1047 = scalar_lea.vmem %s1, 773
  %1048 = vst.msk [vmem:[%s1047] ss:$8 sm:$0xf0] %vm1044, %v1043
  %s1049 = scalar_lea.vmem %s0, 100
  %v1050 = vld.sshfl [vmem:[%s1049] sm:$0xff pattern:$0xb3a29180]
  %1051 = vrot.lane.b32.xlu0 %v1050, 48
  %v1052 = vpop.permute.xlu0 %1051
  %vm1053 = vcmask 130048
  %s1054 = scalar_lea.vmem %s1, 837
  %1055 = vst.msk [vmem:[%s1054] ss:$8 sm:$0xf] %vm1053, %v1052
  %s1056 = scalar_lea.vmem %s1, 837
  %1057 = vst.msk [vmem:[%s1056] ss:$8 sm:$0xf0] %vm1053, %v1052
  %s1058 = scalar_lea.vmem %s0, 112
  %v1059 = vld.sshfl [vmem:[%s1058] sm:$0xff pattern:$0xb3a29180]
  %1060 = vrot.lane.b32.xlu0 %v1059, 48
  %v1061 = vpop.permute.xlu0 %1060
  %vm1062 = vcmask 130048
  %s1063 = scalar_lea.vmem %s1, 901
  %1064 = vst.msk [vmem:[%s1063] ss:$8 sm:$0xf] %vm1062, %v1061
  %s1065 = scalar_lea.vmem %s1, 901
  %1066 = vst.msk [vmem:[%s1065] ss:$8 sm:$0xf0] %vm1062, %v1061
  %s1067 = scalar_lea.vmem %s0, 116
  %v1068 = vld.sshfl [vmem:[%s1067] sm:$0xff pattern:$0xb3a29180]
  %1069 = vrot.lane.b32.xlu0 %v1068, 48
  %v1070 = vpop.permute.xlu0 %1069
  %vm1071 = vcmask 130048
  %s1072 = scalar_lea.vmem %s1, 965
  %1073 = vst.msk [vmem:[%s1072] ss:$8 sm:$0xf] %vm1071, %v1070
  %s1074 = scalar_lea.vmem %s1, 965
  %1075 = vst.msk [vmem:[%s1074] ss:$8 sm:$0xf0] %vm1071, %v1070
  %s1076 = scalar_lea.vmem %s0, 128
  %v1077 = vld.sshfl [vmem:[%s1076] sm:$0xff pattern:$0xb3a29180]
  %1078 = vrot.lane.b32.xlu0 %v1077, 48
  %v1079 = vpop.permute.xlu0 %1078
  %vm1080 = vcmask 130048
  %s1081 = scalar_lea.vmem %s1, 1029
  %1082 = vst.msk [vmem:[%s1081] ss:$8 sm:$0xf] %vm1080, %v1079
  %s1083 = scalar_lea.vmem %s1, 1029
  %1084 = vst.msk [vmem:[%s1083] ss:$8 sm:$0xf0] %vm1080, %v1079
  %s1085 = scalar_lea.vmem %s0, 132
  %v1086 = vld.sshfl [vmem:[%s1085] sm:$0xff pattern:$0xb3a29180]
  %1087 = vrot.lane.b32.xlu0 %v1086, 48
  %v1088 = vpop.permute.xlu0 %1087
  %vm1089 = vcmask 130048
  %s1090 = scalar_lea.vmem %s1, 1093
  %1091 = vst.msk [vmem:[%s1090] ss:$8 sm:$0xf] %vm1089, %v1088
  %s1092 = scalar_lea.vmem %s1, 1093
  %1093 = vst.msk [vmem:[%s1092] ss:$8 sm:$0xf0] %vm1089, %v1088
  %s1094 = scalar_lea.vmem %s0, 144
  %v1095 = vld.sshfl [vmem:[%s1094] sm:$0xff pattern:$0xb3a29180]
  %1096 = vrot.lane.b32.xlu0 %v1095, 48
  %v1097 = vpop.permute.xlu0 %1096
  %vm1098 = vcmask 130048
  %s1099 = scalar_lea.vmem %s1, 1157
  %1100 = vst.msk [vmem:[%s1099] ss:$8 sm:$0xf] %vm1098, %v1097
  %s1101 = scalar_lea.vmem %s1, 1157
  %1102 = vst.msk [vmem:[%s1101] ss:$8 sm:$0xf0] %vm1098, %v1097
  %s1103 = scalar_lea.vmem %s0, 148
  %v1104 = vld.sshfl [vmem:[%s1103] sm:$0xff pattern:$0xb3a29180]
  %1105 = vrot.lane.b32.xlu0 %v1104, 48
  %v1106 = vpop.permute.xlu0 %1105
  %vm1107 = vcmask 130048
  %s1108 = scalar_lea.vmem %s1, 1221
  %1109 = vst.msk [vmem:[%s1108] ss:$8 sm:$0xf] %vm1107, %v1106
  %s1110 = scalar_lea.vmem %s1, 1221
  %1111 = vst.msk [vmem:[%s1110] ss:$8 sm:$0xf0] %vm1107, %v1106
  %v1112 = vld.sshfl [vmem:[%s0] sm:$0xff pattern:$0xb3a29180]
  %1113 = vrot.lane.b32.xlu0 %v1112, 32
  %v1114 = vpop.permute.xlu0 %1113
  %vm1115 = vcmask 130048
  %s1116 = scalar_lea.vmem %s1, 6
  %1117 = vst.msk [vmem:[%s1116] ss:$8 sm:$0xf] %vm1115, %v1114
  %s1118 = scalar_lea.vmem %s1, 6
  %1119 = vst.msk [vmem:[%s1118] ss:$8 sm:$0xf0] %vm1115, %v1114
  %s1120 = scalar_lea.vmem %s0, 4
  %v1121 = vld.sshfl [vmem:[%s1120] sm:$0xff pattern:$0xb3a29180]
  %1122 = vrot.lane.b32.xlu0 %v1121, 32
  %v1123 = vpop.permute.xlu0 %1122
  %vm1124 = vcmask 130048
  %s1125 = scalar_lea.vmem %s1, 70
  %1126 = vst.msk [vmem:[%s1125] ss:$8 sm:$0xf] %vm1124, %v1123
  %s1127 = scalar_lea.vmem %s1, 70
  %1128 = vst.msk [vmem:[%s1127] ss:$8 sm:$0xf0] %vm1124, %v1123
  %s1129 = scalar_lea.vmem %s0, 16
  %v1130 = vld.sshfl [vmem:[%s1129] sm:$0xff pattern:$0xb3a29180]
  %1131 = vrot.lane.b32.xlu0 %v1130, 32
  %v1132 = vpop.permute.xlu0 %1131
  %vm1133 = vcmask 130048
  %s1134 = scalar_lea.vmem %s1, 134
  %1135 = vst.msk [vmem:[%s1134] ss:$8 sm:$0xf] %vm1133, %v1132
  %s1136 = scalar_lea.vmem %s1, 134
  %1137 = vst.msk [vmem:[%s1136] ss:$8 sm:$0xf0] %vm1133, %v1132
  %s1138 = scalar_lea.vmem %s0, 20
  %v1139 = vld.sshfl [vmem:[%s1138] sm:$0xff pattern:$0xb3a29180]
  %1140 = vrot.lane.b32.xlu0 %v1139, 32
  %v1141 = vpop.permute.xlu0 %1140
  %vm1142 = vcmask 130048
  %s1143 = scalar_lea.vmem %s1, 198
  %1144 = vst.msk [vmem:[%s1143] ss:$8 sm:$0xf] %vm1142, %v1141
  %s1145 = scalar_lea.vmem %s1, 198
  %1146 = vst.msk [vmem:[%s1145] ss:$8 sm:$0xf0] %vm1142, %v1141
  %s1147 = scalar_lea.vmem %s0, 32
  %v1148 = vld.sshfl [vmem:[%s1147] sm:$0xff pattern:$0xb3a29180]
  %1149 = vrot.lane.b32.xlu0 %v1148, 32
  %v1150 = vpop.permute.xlu0 %1149
  %vm1151 = vcmask 130048
  %s1152 = scalar_lea.vmem %s1, 262
  %1153 = vst.msk [vmem:[%s1152] ss:$8 sm:$0xf] %vm1151, %v1150
  %s1154 = scalar_lea.vmem %s1, 262
  %1155 = vst.msk [vmem:[%s1154] ss:$8 sm:$0xf0] %vm1151, %v1150
  %s1156 = scalar_lea.vmem %s0, 36
  %v1157 = vld.sshfl [vmem:[%s1156] sm:$0xff pattern:$0xb3a29180]
  %1158 = vrot.lane.b32.xlu0 %v1157, 32
  %v1159 = vpop.permute.xlu0 %1158
  %vm1160 = vcmask 130048
  %s1161 = scalar_lea.vmem %s1, 326
  %1162 = vst.msk [vmem:[%s1161] ss:$8 sm:$0xf] %vm1160, %v1159
  %s1163 = scalar_lea.vmem %s1, 326
  %1164 = vst.msk [vmem:[%s1163] ss:$8 sm:$0xf0] %vm1160, %v1159
  %s1165 = scalar_lea.vmem %s0, 48
  %v1166 = vld.sshfl [vmem:[%s1165] sm:$0xff pattern:$0xb3a29180]
  %1167 = vrot.lane.b32.xlu0 %v1166, 32
  %v1168 = vpop.permute.xlu0 %1167
  %vm1169 = vcmask 130048
  %s1170 = scalar_lea.vmem %s1, 390
  %1171 = vst.msk [vmem:[%s1170] ss:$8 sm:$0xf] %vm1169, %v1168
  %s1172 = scalar_lea.vmem %s1, 390
  %1173 = vst.msk [vmem:[%s1172] ss:$8 sm:$0xf0] %vm1169, %v1168
  %s1174 = scalar_lea.vmem %s0, 52
  %v1175 = vld.sshfl [vmem:[%s1174] sm:$0xff pattern:$0xb3a29180]
  %1176 = vrot.lane.b32.xlu0 %v1175, 32
  %v1177 = vpop.permute.xlu0 %1176
  %vm1178 = vcmask 130048
  %s1179 = scalar_lea.vmem %s1, 454
  %1180 = vst.msk [vmem:[%s1179] ss:$8 sm:$0xf] %vm1178, %v1177
  %s1181 = scalar_lea.vmem %s1, 454
  %1182 = vst.msk [vmem:[%s1181] ss:$8 sm:$0xf0] %vm1178, %v1177
  %s1183 = scalar_lea.vmem %s0, 64
  %v1184 = vld.sshfl [vmem:[%s1183] sm:$0xff pattern:$0xb3a29180]
  %1185 = vrot.lane.b32.xlu0 %v1184, 32
  %v1186 = vpop.permute.xlu0 %1185
  %vm1187 = vcmask 130048
  %s1188 = scalar_lea.vmem %s1, 518
  %1189 = vst.msk [vmem:[%s1188] ss:$8 sm:$0xf] %vm1187, %v1186
  %s1190 = scalar_lea.vmem %s1, 518
  %1191 = vst.msk [vmem:[%s1190] ss:$8 sm:$0xf0] %vm1187, %v1186
  %s1192 = scalar_lea.vmem %s0, 68
  %v1193 = vld.sshfl [vmem:[%s1192] sm:$0xff pattern:$0xb3a29180]
  %1194 = vrot.lane.b32.xlu0 %v1193, 32
  %v1195 = vpop.permute.xlu0 %1194
  %vm1196 = vcmask 130048
  %s1197 = scalar_lea.vmem %s1, 582
  %1198 = vst.msk [vmem:[%s1197] ss:$8 sm:$0xf] %vm1196, %v1195
  %s1199 = scalar_lea.vmem %s1, 582
  %1200 = vst.msk [vmem:[%s1199] ss:$8 sm:$0xf0] %vm1196, %v1195
  %s1201 = scalar_lea.vmem %s0, 80
  %v1202 = vld.sshfl [vmem:[%s1201] sm:$0xff pattern:$0xb3a29180]
  %1203 = vrot.lane.b32.xlu0 %v1202, 32
  %v1204 = vpop.permute.xlu0 %1203
  %vm1205 = vcmask 130048
  %s1206 = scalar_lea.vmem %s1, 646
  %1207 = vst.msk [vmem:[%s1206] ss:$8 sm:$0xf] %vm1205, %v1204
  %s1208 = scalar_lea.vmem %s1, 646
  %1209 = vst.msk [vmem:[%s1208] ss:$8 sm:$0xf0] %vm1205, %v1204
  %s1210 = scalar_lea.vmem %s0, 84
  %v1211 = vld.sshfl [vmem:[%s1210] sm:$0xff pattern:$0xb3a29180]
  %1212 = vrot.lane.b32.xlu0 %v1211, 32
  %v1213 = vpop.permute.xlu0 %1212
  %vm1214 = vcmask 130048
  %s1215 = scalar_lea.vmem %s1, 710
  %1216 = vst.msk [vmem:[%s1215] ss:$8 sm:$0xf] %vm1214, %v1213
  %s1217 = scalar_lea.vmem %s1, 710
  %1218 = vst.msk [vmem:[%s1217] ss:$8 sm:$0xf0] %vm1214, %v1213
  %s1219 = scalar_lea.vmem %s0, 96
  %v1220 = vld.sshfl [vmem:[%s1219] sm:$0xff pattern:$0xb3a29180]
  %1221 = vrot.lane.b32.xlu0 %v1220, 32
  %v1222 = vpop.permute.xlu0 %1221
  %vm1223 = vcmask 130048
  %s1224 = scalar_lea.vmem %s1, 774
  %1225 = vst.msk [vmem:[%s1224] ss:$8 sm:$0xf] %vm1223, %v1222
  %s1226 = scalar_lea.vmem %s1, 774
  %1227 = vst.msk [vmem:[%s1226] ss:$8 sm:$0xf0] %vm1223, %v1222
  %s1228 = scalar_lea.vmem %s0, 100
  %v1229 = vld.sshfl [vmem:[%s1228] sm:$0xff pattern:$0xb3a29180]
  %1230 = vrot.lane.b32.xlu0 %v1229, 32
  %v1231 = vpop.permute.xlu0 %1230
  %vm1232 = vcmask 130048
  %s1233 = scalar_lea.vmem %s1, 838
  %1234 = vst.msk [vmem:[%s1233] ss:$8 sm:$0xf] %vm1232, %v1231
  %s1235 = scalar_lea.vmem %s1, 838
  %1236 = vst.msk [vmem:[%s1235] ss:$8 sm:$0xf0] %vm1232, %v1231
  %s1237 = scalar_lea.vmem %s0, 112
  %v1238 = vld.sshfl [vmem:[%s1237] sm:$0xff pattern:$0xb3a29180]
  %1239 = vrot.lane.b32.xlu0 %v1238, 32
  %v1240 = vpop.permute.xlu0 %1239
  %vm1241 = vcmask 130048
  %s1242 = scalar_lea.vmem %s1, 902
  %1243 = vst.msk [vmem:[%s1242] ss:$8 sm:$0xf] %vm1241, %v1240
  %s1244 = scalar_lea.vmem %s1, 902
  %1245 = vst.msk [vmem:[%s1244] ss:$8 sm:$0xf0] %vm1241, %v1240
  %s1246 = scalar_lea.vmem %s0, 116
  %v1247 = vld.sshfl [vmem:[%s1246] sm:$0xff pattern:$0xb3a29180]
  %1248 = vrot.lane.b32.xlu0 %v1247, 32
  %v1249 = vpop.permute.xlu0 %1248
  %vm1250 = vcmask 130048
  %s1251 = scalar_lea.vmem %s1, 966
  %1252 = vst.msk [vmem:[%s1251] ss:$8 sm:$0xf] %vm1250, %v1249
  %s1253 = scalar_lea.vmem %s1, 966
  %1254 = vst.msk [vmem:[%s1253] ss:$8 sm:$0xf0] %vm1250, %v1249
  %s1255 = scalar_lea.vmem %s0, 128
  %v1256 = vld.sshfl [vmem:[%s1255] sm:$0xff pattern:$0xb3a29180]
  %1257 = vrot.lane.b32.xlu0 %v1256, 32
  %v1258 = vpop.permute.xlu0 %1257
  %vm1259 = vcmask 130048
  %s1260 = scalar_lea.vmem %s1, 1030
  %1261 = vst.msk [vmem:[%s1260] ss:$8 sm:$0xf] %vm1259, %v1258
  %s1262 = scalar_lea.vmem %s1, 1030
  %1263 = vst.msk [vmem:[%s1262] ss:$8 sm:$0xf0] %vm1259, %v1258
  %s1264 = scalar_lea.vmem %s0, 132
  %v1265 = vld.sshfl [vmem:[%s1264] sm:$0xff pattern:$0xb3a29180]
  %1266 = vrot.lane.b32.xlu0 %v1265, 32
  %v1267 = vpop.permute.xlu0 %1266
  %vm1268 = vcmask 130048
  %s1269 = scalar_lea.vmem %s1, 1094
  %1270 = vst.msk [vmem:[%s1269] ss:$8 sm:$0xf] %vm1268, %v1267
  %s1271 = scalar_lea.vmem %s1, 1094
  %1272 = vst.msk [vmem:[%s1271] ss:$8 sm:$0xf0] %vm1268, %v1267
  %s1273 = scalar_lea.vmem %s0, 144
  %v1274 = vld.sshfl [vmem:[%s1273] sm:$0xff pattern:$0xb3a29180]
  %1275 = vrot.lane.b32.xlu0 %v1274, 32
  %v1276 = vpop.permute.xlu0 %1275
  %vm1277 = vcmask 130048
  %s1278 = scalar_lea.vmem %s1, 1158
  %1279 = vst.msk [vmem:[%s1278] ss:$8 sm:$0xf] %vm1277, %v1276
  %s1280 = scalar_lea.vmem %s1, 1158
  %1281 = vst.msk [vmem:[%s1280] ss:$8 sm:$0xf0] %vm1277, %v1276
  %s1282 = scalar_lea.vmem %s0, 148
  %v1283 = vld.sshfl [vmem:[%s1282] sm:$0xff pattern:$0xb3a29180]
  %1284 = vrot.lane.b32.xlu0 %v1283, 32
  %v1285 = vpop.permute.xlu0 %1284
  %vm1286 = vcmask 130048
  %s1287 = scalar_lea.vmem %s1, 1222
  %1288 = vst.msk [vmem:[%s1287] ss:$8 sm:$0xf] %vm1286, %v1285
  %s1289 = scalar_lea.vmem %s1, 1222
  %1290 = vst.msk [vmem:[%s1289] ss:$8 sm:$0xf0] %vm1286, %v1285
  %v1291 = vld.sshfl [vmem:[%s0] sm:$0xff pattern:$0xb3a29180]
  %1292 = vrot.lane.b32.xlu0 %v1291, 16
  %v1293 = vpop.permute.xlu0 %1292
  %vm1294 = vcmask 130048
  %s1295 = scalar_lea.vmem %s1, 7
  %1296 = vst.msk [vmem:[%s1295] ss:$8 sm:$0xf] %vm1294, %v1293
  %s1297 = scalar_lea.vmem %s1, 7
  %1298 = vst.msk [vmem:[%s1297] ss:$8 sm:$0xf0] %vm1294, %v1293
  %s1299 = scalar_lea.vmem %s0, 4
  %v1300 = vld.sshfl [vmem:[%s1299] sm:$0xff pattern:$0xb3a29180]
  %1301 = vrot.lane.b32.xlu0 %v1300, 16
  %v1302 = vpop.permute.xlu0 %1301
  %vm1303 = vcmask 130048
  %s1304 = scalar_lea.vmem %s1, 71
  %1305 = vst.msk [vmem:[%s1304] ss:$8 sm:$0xf] %vm1303, %v1302
  %s1306 = scalar_lea.vmem %s1, 71
  %1307 = vst.msk [vmem:[%s1306] ss:$8 sm:$0xf0] %vm1303, %v1302
  %s1308 = scalar_lea.vmem %s0, 16
  %v1309 = vld.sshfl [vmem:[%s1308] sm:$0xff pattern:$0xb3a29180]
  %1310 = vrot.lane.b32.xlu0 %v1309, 16
  %v1311 = vpop.permute.xlu0 %1310
  %vm1312 = vcmask 130048
  %s1313 = scalar_lea.vmem %s1, 135
  %1314 = vst.msk [vmem:[%s1313] ss:$8 sm:$0xf] %vm1312, %v1311
  %s1315 = scalar_lea.vmem %s1, 135
  %1316 = vst.msk [vmem:[%s1315] ss:$8 sm:$0xf0] %vm1312, %v1311
  %s1317 = scalar_lea.vmem %s0, 20
  %v1318 = vld.sshfl [vmem:[%s1317] sm:$0xff pattern:$0xb3a29180]
  %1319 = vrot.lane.b32.xlu0 %v1318, 16
  %v1320 = vpop.permute.xlu0 %1319
  %vm1321 = vcmask 130048
  %s1322 = scalar_lea.vmem %s1, 199
  %1323 = vst.msk [vmem:[%s1322] ss:$8 sm:$0xf] %vm1321, %v1320
  %s1324 = scalar_lea.vmem %s1, 199
  %1325 = vst.msk [vmem:[%s1324] ss:$8 sm:$0xf0] %vm1321, %v1320
  %s1326 = scalar_lea.vmem %s0, 32
  %v1327 = vld.sshfl [vmem:[%s1326] sm:$0xff pattern:$0xb3a29180]
  %1328 = vrot.lane.b32.xlu0 %v1327, 16
  %v1329 = vpop.permute.xlu0 %1328
  %vm1330 = vcmask 130048
  %s1331 = scalar_lea.vmem %s1, 263
  %1332 = vst.msk [vmem:[%s1331] ss:$8 sm:$0xf] %vm1330, %v1329
  %s1333 = scalar_lea.vmem %s1, 263
  %1334 = vst.msk [vmem:[%s1333] ss:$8 sm:$0xf0] %vm1330, %v1329
  %s1335 = scalar_lea.vmem %s0, 36
  %v1336 = vld.sshfl [vmem:[%s1335] sm:$0xff pattern:$0xb3a29180]
  %1337 = vrot.lane.b32.xlu0 %v1336, 16
  %v1338 = vpop.permute.xlu0 %1337
  %vm1339 = vcmask 130048
  %s1340 = scalar_lea.vmem %s1, 327
  %1341 = vst.msk [vmem:[%s1340] ss:$8 sm:$0xf] %vm1339, %v1338
  %s1342 = scalar_lea.vmem %s1, 327
  %1343 = vst.msk [vmem:[%s1342] ss:$8 sm:$0xf0] %vm1339, %v1338
  %s1344 = scalar_lea.vmem %s0, 48
  %v1345 = vld.sshfl [vmem:[%s1344] sm:$0xff pattern:$0xb3a29180]
  %1346 = vrot.lane.b32.xlu0 %v1345, 16
  %v1347 = vpop.permute.xlu0 %1346
  %vm1348 = vcmask 130048
  %s1349 = scalar_lea.vmem %s1, 391
  %1350 = vst.msk [vmem:[%s1349] ss:$8 sm:$0xf] %vm1348, %v1347
  %s1351 = scalar_lea.vmem %s1, 391
  %1352 = vst.msk [vmem:[%s1351] ss:$8 sm:$0xf0] %vm1348, %v1347
  %s1353 = scalar_lea.vmem %s0, 52
  %v1354 = vld.sshfl [vmem:[%s1353] sm:$0xff pattern:$0xb3a29180]
  %1355 = vrot.lane.b32.xlu0 %v1354, 16
  %v1356 = vpop.permute.xlu0 %1355
  %vm1357 = vcmask 130048
  %s1358 = scalar_lea.vmem %s1, 455
  %1359 = vst.msk [vmem:[%s1358] ss:$8 sm:$0xf] %vm1357, %v1356
  %s1360 = scalar_lea.vmem %s1, 455
  %1361 = vst.msk [vmem:[%s1360] ss:$8 sm:$0xf0] %vm1357, %v1356
  %s1362 = scalar_lea.vmem %s0, 64
  %v1363 = vld.sshfl [vmem:[%s1362] sm:$0xff pattern:$0xb3a29180]
  %1364 = vrot.lane.b32.xlu0 %v1363, 16
  %v1365 = vpop.permute.xlu0 %1364
  %vm1366 = vcmask 130048
  %s1367 = scalar_lea.vmem %s1, 519
  %1368 = vst.msk [vmem:[%s1367] ss:$8 sm:$0xf] %vm1366, %v1365
  %s1369 = scalar_lea.vmem %s1, 519
  %1370 = vst.msk [vmem:[%s1369] ss:$8 sm:$0xf0] %vm1366, %v1365
  %s1371 = scalar_lea.vmem %s0, 68
  %v1372 = vld.sshfl [vmem:[%s1371] sm:$0xff pattern:$0xb3a29180]
  %1373 = vrot.lane.b32.xlu0 %v1372, 16
  %v1374 = vpop.permute.xlu0 %1373
  %vm1375 = vcmask 130048
  %s1376 = scalar_lea.vmem %s1, 583
  %1377 = vst.msk [vmem:[%s1376] ss:$8 sm:$0xf] %vm1375, %v1374
  %s1378 = scalar_lea.vmem %s1, 583
  %1379 = vst.msk [vmem:[%s1378] ss:$8 sm:$0xf0] %vm1375, %v1374
  %s1380 = scalar_lea.vmem %s0, 80
  %v1381 = vld.sshfl [vmem:[%s1380] sm:$0xff pattern:$0xb3a29180]
  %1382 = vrot.lane.b32.xlu0 %v1381, 16
  %v1383 = vpop.permute.xlu0 %1382
  %vm1384 = vcmask 130048
  %s1385 = scalar_lea.vmem %s1, 647
  %1386 = vst.msk [vmem:[%s1385] ss:$8 sm:$0xf] %vm1384, %v1383
  %s1387 = scalar_lea.vmem %s1, 647
  %1388 = vst.msk [vmem:[%s1387] ss:$8 sm:$0xf0] %vm1384, %v1383
  %s1389 = scalar_lea.vmem %s0, 84
  %v1390 = vld.sshfl [vmem:[%s1389] sm:$0xff pattern:$0xb3a29180]
  %1391 = vrot.lane.b32.xlu0 %v1390, 16
  %v1392 = vpop.permute.xlu0 %1391
  %vm1393 = vcmask 130048
  %s1394 = scalar_lea.vmem %s1, 711
  %1395 = vst.msk [vmem:[%s1394] ss:$8 sm:$0xf] %vm1393, %v1392
  %s1396 = scalar_lea.vmem %s1, 711
  %1397 = vst.msk [vmem:[%s1396] ss:$8 sm:$0xf0] %vm1393, %v1392
  %s1398 = scalar_lea.vmem %s0, 96
  %v1399 = vld.sshfl [vmem:[%s1398] sm:$0xff pattern:$0xb3a29180]
  %1400 = vrot.lane.b32.xlu0 %v1399, 16
  %v1401 = vpop.permute.xlu0 %1400
  %vm1402 = vcmask 130048
  %s1403 = scalar_lea.vmem %s1, 775
  %1404 = vst.msk [vmem:[%s1403] ss:$8 sm:$0xf] %vm1402, %v1401
  %s1405 = scalar_lea.vmem %s1, 775
  %1406 = vst.msk [vmem:[%s1405] ss:$8 sm:$0xf0] %vm1402, %v1401
  %s1407 = scalar_lea.vmem %s0, 100
  %v1408 = vld.sshfl [vmem:[%s1407] sm:$0xff pattern:$0xb3a29180]
  %1409 = vrot.lane.b32.xlu0 %v1408, 16
  %v1410 = vpop.permute.xlu0 %1409
  %vm1411 = vcmask 130048
  %s1412 = scalar_lea.vmem %s1, 839
  %1413 = vst.msk [vmem:[%s1412] ss:$8 sm:$0xf] %vm1411, %v1410
  %s1414 = scalar_lea.vmem %s1, 839
  %1415 = vst.msk [vmem:[%s1414] ss:$8 sm:$0xf0] %vm1411, %v1410
  %s1416 = scalar_lea.vmem %s0, 112
  %v1417 = vld.sshfl [vmem:[%s1416] sm:$0xff pattern:$0xb3a29180]
  %1418 = vrot.lane.b32.xlu0 %v1417, 16
  %v1419 = vpop.permute.xlu0 %1418
  %vm1420 = vcmask 130048
  %s1421 = scalar_lea.vmem %s1, 903
  %1422 = vst.msk [vmem:[%s1421] ss:$8 sm:$0xf] %vm1420, %v1419
  %s1423 = scalar_lea.vmem %s1, 903
  %1424 = vst.msk [vmem:[%s1423] ss:$8 sm:$0xf0] %vm1420, %v1419
  %s1425 = scalar_lea.vmem %s0, 116
  %v1426 = vld.sshfl [vmem:[%s1425] sm:$0xff pattern:$0xb3a29180]
  %1427 = vrot.lane.b32.xlu0 %v1426, 16
  %v1428 = vpop.permute.xlu0 %1427
  %vm1429 = vcmask 130048
  %s1430 = scalar_lea.vmem %s1, 967
  %1431 = vst.msk [vmem:[%s1430] ss:$8 sm:$0xf] %vm1429, %v1428
  %s1432 = scalar_lea.vmem %s1, 967
  %1433 = vst.msk [vmem:[%s1432] ss:$8 sm:$0xf0] %vm1429, %v1428
  %s1434 = scalar_lea.vmem %s0, 128
  %v1435 = vld.sshfl [vmem:[%s1434] sm:$0xff pattern:$0xb3a29180]
  %1436 = vrot.lane.b32.xlu0 %v1435, 16
  %v1437 = vpop.permute.xlu0 %1436
  %vm1438 = vcmask 130048
  %s1439 = scalar_lea.vmem %s1, 1031
  %1440 = vst.msk [vmem:[%s1439] ss:$8 sm:$0xf] %vm1438, %v1437
  %s1441 = scalar_lea.vmem %s1, 1031
  %1442 = vst.msk [vmem:[%s1441] ss:$8 sm:$0xf0] %vm1438, %v1437
  %s1443 = scalar_lea.vmem %s0, 132
  %v1444 = vld.sshfl [vmem:[%s1443] sm:$0xff pattern:$0xb3a29180]
  %1445 = vrot.lane.b32.xlu0 %v1444, 16
  %v1446 = vpop.permute.xlu0 %1445
  %vm1447 = vcmask 130048
  %s1448 = scalar_lea.vmem %s1, 1095
  %1449 = vst.msk [vmem:[%s1448] ss:$8 sm:$0xf] %vm1447, %v1446
  %s1450 = scalar_lea.vmem %s1, 1095
  %1451 = vst.msk [vmem:[%s1450] ss:$8 sm:$0xf0] %vm1447, %v1446
  %s1452 = scalar_lea.vmem %s0, 144
  %v1453 = vld.sshfl [vmem:[%s1452] sm:$0xff pattern:$0xb3a29180]
  %1454 = vrot.lane.b32.xlu0 %v1453, 16
  %v1455 = vpop.permute.xlu0 %1454
  %vm1456 = vcmask 130048
  %s1457 = scalar_lea.vmem %s1, 1159
  %1458 = vst.msk [vmem:[%s1457] ss:$8 sm:$0xf] %vm1456, %v1455
  %s1459 = scalar_lea.vmem %s1, 1159
  %1460 = vst.msk [vmem:[%s1459] ss:$8 sm:$0xf0] %vm1456, %v1455
  %s1461 = scalar_lea.vmem %s0, 148
  %v1462 = vld.sshfl [vmem:[%s1461] sm:$0xff pattern:$0xb3a29180]
  %1463 = vrot.lane.b32.xlu0 %v1462, 16
  %v1464 = vpop.permute.xlu0 %1463
  %vm1465 = vcmask 130048
  %s1466 = scalar_lea.vmem %s1, 1223
  %1467 = vst.msk [vmem:[%s1466] ss:$8 sm:$0xf] %vm1465, %v1464
  %s1468 = scalar_lea.vmem %s1, 1223
  %1469 = vst.msk [vmem:[%s1468] ss:$8 sm:$0xf0] %vm1465, %v1464

// kernel: convgru_forward_pallas.1
$region0: #{convgru_forward_pallas.1}
  #allocation0 [shape = 'u32[]', space=smem, size = 0x4, offset = 0x4, fixed_abs, tag = 'smem constant byte address 0x4 - core index']
  #allocation1 [shape = 'u32[144,128]{1,0:T(1,128)}', space=vmem, size = 0x12000, scoped, tag = 'internal scratch']
  #allocation2 [shape = 'f32[8,290]{1,0:T(8,128)}', space=vmem, size = 0x3000, scoped, tag = 'scratch operand']
  #allocation3 [shape = 'f32[8,290]{1,0:T(8,128)}', space=vmem, size = 0x3000, scoped, tag = 'scratch operand']
  #allocation4 [shape = 's32[1]{0}', space=sflag, size = 0x4, scoped, tag = 'scoped memory for convgru_forward_pallas.1']
  #allocation5 [shape = 'u8[512]{0}', space=smem, size = 0x200, scoped, tag = 'prefetched SMEM operand 0']
  %s0 = inlined_call_operand.vmem [shape: s32[10], index: 0, kind: input, shape index: {}]
  %s1 = inlined_call_operand.vmem [shape: f32[8,37,256], index: 1, kind: input, shape index: {}]
  %s2 = inlined_call_operand.vmem [shape: f32[2,24,37], index: 2, kind: input, shape index: {}]
  %s3 = inlined_call_operand.vmem [shape: f32[2,16,72], index: 3, kind: input, shape index: {}]
  %s4 = inlined_call_operand.vmem [shape: f32[2,8,72], index: 4, kind: input, shape index: {}]
  %s5 = inlined_call_operand.vmem [shape: f32[2,10,8,256], index: 5, kind: output, shape index: {}]
  %s6 = sld [smem:[#allocation0]]
  $region53: #{convgru_forward_pallas.1} parent=0
    _
  %s8 = ssub.s32 1, %s6
  %s9 = scalar_select 0, %s8, %s6
  %s10 = sshll.u32 %s0, 4
  %s11 = int_to_ptr.vmem [resolvable:$true] %s10
  %13 = dma.vmem_to_smem %s11, 16, [#allocation5], [#allocation4]
  %14 = dma.done [#allocation4], 16
  %15 = sfence
  loop: start=0, step=1, limit=22
  $region2: #{convgru_forward_pallas.1} parent=0 // loop_pre_header
    _
  $region3: #{convgru_forward_pallas.1} parent=0 // loop_header
    %s17 = sphi 0, %s21
    %p18 = scmp.ge.s32.totalorder %s17, 22
    %s24 = sphi 0, %s36
    %s25 = sphi 0, %s32
    %s26 = sphi 0, %s24
    %s27 = sphi 0, %s25
    %s28 = sphi 0, %s26
    %s29 = sphi 0, %s27
    %s41 = sphi 0, %s43
    %s44 = sphi 0, %s41
    %s45 = sphi 0, %s44
    %s61 = sphi 0, %s45
    %s67 = sphi 0, %s69
    %s70 = sphi 0, %s67
    %s71 = sphi 0, %s70
    %s87 = sphi 0, %s71
    %s93 = sphi 0, %s95
    %s96 = sphi 0, %s93
    %s97 = sphi 0, %s96
    %s113 = sphi 0, %s97
    %s119 = sphi 0, %s121
    %s122 = sphi 0, %s119
    %s123 = sphi 0, %s122
    %s139 = sphi 0, %s123
    %s147 = sphi 0, %s149
    %s150 = sphi 0, %s147
    %s151 = sphi 0, %s150
    %s167 = sphi 0, %s151
  $region4: #{convgru_forward_pallas.1} parent=0 // loop_header_branch
    %20 = sbr.rel (%p18) target = $region8
  $region5: #{convgru_forward_pallas.1} parent=0 // loop_body
    %s22 = ssub.s32 %s17, 1
    %s23 = ssub.s32 %s17, 2
    %s30 = sadd.s32 1, %s25
    %p31 = scmp.ge.s32.totalorder %s30, 10
    %s32 = scalar_select %p31, 0, %s30
    %s33 = sadd.s32 1, %s24
    %s34 = scalar_select %p31, %s33, %s24
    %p35 = scmp.ge.s32.totalorder %s34, 2
    %s36 = scalar_select %p35, 0, %s34
    %s37 = sld [smem:[#allocation5 + %s25]]
    %s38 = sld [smem:[#allocation5 + %s32]]
    %s39 = ssub.s32 %s37, %s38
    %p40 = scmp.eq.s32.totalorder %s39, 0
    %s42 = sadd.s32 %s41, 1
    %s43 = scalar_select %p40, %s41, %s42
    %p46 = pneg %p40
    %p47 = scmp.eq.s32.totalorder %s17, 19
    %p48 = por %p46, %p47
    %p49 = scmp.ne.s32.totalorder %s41, %s44
    %p50 = scmp.eq.s32.totalorder %s17, 0
    %p51 = por %p49, %p50
    %p52 = scmp.ne.s32.totalorder %s41, %s44
    %p53 = scmp.eq.s32.totalorder %s22, 19
    %p54 = por %p52, %p53
    %p55 = scmp.ne.s32.totalorder %s44, %s45
    %p56 = scmp.eq.s32.totalorder %s22, 0
    %p57 = por %p55, %p56
    %p58 = scmp.ne.s32.totalorder %s44, %s45
    %p59 = scmp.eq.s32.totalorder %s23, 19
    %p60 = por %p58, %p59
    %p62 = scmp.ne.s32.totalorder %s45, %s61
    %p63 = scmp.eq.s32.totalorder %s23, 0
    %p64 = por %p62, %p63
    %s65 = ssub.s32 %s24, %s36
    %p66 = scmp.eq.s32.totalorder %s65, 0
    %s68 = sadd.s32 %s67, 1
    %s69 = scalar_select %p66, %s67, %s68
    %p72 = pneg %p66
    %p73 = scmp.eq.s32.totalorder %s17, 19
    %p74 = por %p72, %p73
    %p75 = scmp.ne.s32.totalorder %s67, %s70
    %p76 = scmp.eq.s32.totalorder %s17, 0
    %p77 = por %p75, %p76
    %p78 = scmp.ne.s32.totalorder %s67, %s70
    %p79 = scmp.eq.s32.totalorder %s22, 19
    %p80 = por %p78, %p79
    %p81 = scmp.ne.s32.totalorder %s70, %s71
    %p82 = scmp.eq.s32.totalorder %s22, 0
    %p83 = por %p81, %p82
    %p84 = scmp.ne.s32.totalorder %s70, %s71
    %p85 = scmp.eq.s32.totalorder %s23, 19
    %p86 = por %p84, %p85
    %p88 = scmp.ne.s32.totalorder %s71, %s87
    %p89 = scmp.eq.s32.totalorder %s23, 0
    %p90 = por %p88, %p89
    %s91 = ssub.s32 %s24, %s36
    %p92 = scmp.eq.s32.totalorder %s91, 0
    %s94 = sadd.s32 %s93, 1
    %s95 = scalar_select %p92, %s93, %s94
    %p98 = pneg %p92
    %p99 = scmp.eq.s32.totalorder %s17, 19
    %p100 = por %p98, %p99
    %p101 = scmp.ne.s32.totalorder %s93, %s96
    %p102 = scmp.eq.s32.totalorder %s17, 0
    %p103 = por %p101, %p102
    %p104 = scmp.ne.s32.totalorder %s93, %s96
    %p105 = scmp.eq.s32.totalorder %s22, 19
    %p106 = por %p104, %p105
    %p107 = scmp.ne.s32.totalorder %s96, %s97
    %p108 = scmp.eq.s32.totalorder %s22, 0
    %p109 = por %p107, %p108
    %p110 = scmp.ne.s32.totalorder %s96, %s97
    %p111 = scmp.eq.s32.totalorder %s23, 19
    %p112 = por %p110, %p111
    %p114 = scmp.ne.s32.totalorder %s97, %s113
    %p115 = scmp.eq.s32.totalorder %s23, 0
    %p116 = por %p114, %p115
    %s117 = ssub.s32 %s24, %s36
    %p118 = scmp.eq.s32.totalorder %s117, 0
    %s120 = sadd.s32 %s119, 1
    %s121 = scalar_select %p118, %s119, %s120
    %p124 = pneg %p118
    %p125 = scmp.eq.s32.totalorder %s17, 19
    %p126 = por %p124, %p125
    %p127 = scmp.ne.s32.totalorder %s119, %s122
    %p128 = scmp.eq.s32.totalorder %s17, 0
    %p129 = por %p127, %p128
    %p130 = scmp.ne.s32.totalorder %s119, %s122
    %p131 = scmp.eq.s32.totalorder %s22, 19
    %p132 = por %p130, %p131
    %p133 = scmp.ne.s32.totalorder %s122, %s123
    %p134 = scmp.eq.s32.totalorder %s22, 0
    %p135 = por %p133, %p134
    %p136 = scmp.ne.s32.totalorder %s122, %s123
    %p137 = scmp.eq.s32.totalorder %s23, 19
    %p138 = por %p136, %p137
    %p140 = scmp.ne.s32.totalorder %s123, %s139
    %p141 = scmp.eq.s32.totalorder %s23, 0
    %p142 = por %p140, %p141
    %s143 = ssub.s32 %s24, %s36
    %s144 = ssub.s32 %s25, %s32
    %s145 = sor.u32 %s143, %s144
    %p146 = scmp.eq.s32.totalorder %s145, 0
    %s148 = sadd.s32 %s147, 1
    %s149 = scalar_select %p146, %s147, %s148
    %p152 = pneg %p146
    %p153 = scmp.eq.s32.totalorder %s17, 19
    %p154 = por %p152, %p153
    %p155 = scmp.ne.s32.totalorder %s147, %s150
    %p156 = scmp.eq.s32.totalorder %s17, 0
    %p157 = por %p155, %p156
    %p158 = scmp.ne.s32.totalorder %s147, %s150
    %p159 = scmp.eq.s32.totalorder %s22, 19
    %p160 = por %p158, %p159
    %p161 = scmp.ne.s32.totalorder %s150, %s151
    %p162 = scmp.eq.s32.totalorder %s22, 0
    %p163 = por %p161, %p162
    %p164 = scmp.ne.s32.totalorder %s150, %s151
    %p165 = scmp.eq.s32.totalorder %s23, 19
    %p166 = por %p164, %p165
    %p168 = scmp.ne.s32.totalorder %s151, %s167
    %p169 = scmp.eq.s32.totalorder %s23, 0
    %p170 = por %p168, %p169
    %p171 = scmp.le.s32.totalorder 1, %s17
    %p172 = scmp.lt.s32.totalorder %s17, 21
    %p173 = pnand %p171, %p172
    %p174 = pneg %p173
    // Predicated region
    $region9: #{convgru_forward_pallas.1} parent=5 // pred_check
      _
    $region10: #{convgru_forward_pallas.1} parent=5 // pred_check_branch
      %176 = sbr.rel (%p173) target = $region12
    $region11: #{convgru_forward_pallas.1} parent=5 // pred_region
      %s177 = ssub.s32 %s17, 1
    $region12: #{convgru_forward_pallas.1} parent=5 // pred_fallthru
      _
    %p178 = scmp.lt.s32.totalorder %s17, 20
    // Predicated region
    $region13: #{convgru_forward_pallas.1} parent=5 // pred_check
      %p179 = pneg %p178
    $region14: #{convgru_forward_pallas.1} parent=5 // pred_check_branch
      %181 = sbr.rel (%p179) target = $region16
    $region15: #{convgru_forward_pallas.1} parent=5 // pred_region
      // Predicated region
      $region17: #{convgru_forward_pallas.1} parent=15 // pred_check
        %p182 = pneg %p51
      $region18: #{convgru_forward_pallas.1} parent=15 // pred_check_branch
        %184 = sbr.rel (%p182) target = $region20
      $region19: #{convgru_forward_pallas.1} parent=15 // pred_region
        %s185 = sld [smem:[#allocation5 + %s25]]
        %p186 = scmp.lt.s32.totalorder %s185, 7
        %s187 = scalar_select %p186, %s185, 7
        %s188 = smul.addr %s187, 10
        %s189 = smul.addr %s188, 8
        %s190 = scalar_lea.vmem %s1, %s189
        %s191 = sld [smem:[#allocation5 + %s25]]
      $region20: #{convgru_forward_pallas.1} parent=15 // pred_fallthru
        _
      // Predicated region
      $region21: #{convgru_forward_pallas.1} parent=15 // pred_check
        %p192 = pneg %p77
      $region22: #{convgru_forward_pallas.1} parent=15 // pred_check_branch
        %194 = sbr.rel (%p192) target = $region24
      $region23: #{convgru_forward_pallas.1} parent=15 // pred_region
        %p195 = scmp.lt.s32.totalorder %s24, 1
        %s196 = scalar_select %p195, %s24, 1
        %s197 = smul.addr %s196, 3
        %s198 = smul.addr %s197, 8
        %s199 = scalar_lea.vmem %s2, %s198
      $region24: #{convgru_forward_pallas.1} parent=15 // pred_fallthru
        _
      // Predicated region
      $region25: #{convgru_forward_pallas.1} parent=15 // pred_check
        %p200 = pneg %p103
      $region26: #{convgru_forward_pallas.1} parent=15 // pred_check_branch
        %202 = sbr.rel (%p200) target = $region28
      $region27: #{convgru_forward_pallas.1} parent=15 // pred_region
        %p203 = scmp.lt.s32.totalorder %s24, 1
        %s204 = scalar_select %p203, %s24, 1
        %s205 = smul.addr %s204, 2
        %s206 = smul.addr %s205, 8
        %s207 = scalar_lea.vmem %s3, %s206
      $region28: #{convgru_forward_pallas.1} parent=15 // pred_fallthru
        _
      // Predicated region
      $region29: #{convgru_forward_pallas.1} parent=15 // pred_check
        %p208 = pneg %p129
      $region30: #{convgru_forward_pallas.1} parent=15 // pred_check_branch
        %210 = sbr.rel (%p208) target = $region32
      $region31: #{convgru_forward_pallas.1} parent=15 // pred_region
        %p211 = scmp.lt.s32.totalorder %s24, 1
        %s212 = scalar_select %p211, %s24, 1
        %s213 = smul.addr %s212, 8
        %s214 = scalar_lea.vmem %s4, %s213
      $region32: #{convgru_forward_pallas.1} parent=15 // pred_fallthru
        _
    $region16: #{convgru_forward_pallas.1} parent=5 // pred_fallthru
      _
    %p215 = scmp.le.s32.totalorder 1, %s17
    %p216 = scmp.lt.s32.totalorder %s17, 21
    %p217 = pnand %p215, %p216
    %p218 = pneg %p217
    // Predicated region
    $region33: #{convgru_forward_pallas.1} parent=5 // pred_check
      _
    $region34: #{convgru_forward_pallas.1} parent=5 // pred_check_branch
      %220 = sbr.rel (%p217) target = $region36
    $region35: #{convgru_forward_pallas.1} parent=5 // pred_region
      %s221 = ssub.s32 %s17, 1
      %s222 = sld [smem:[#allocation5 + %s27]]
      %p223 = scmp.lt.s32.totalorder %s222, 7
      %s224 = scalar_select %p223, %s222, 7
      %s225 = smul.addr %s224, 10
      %s226 = smul.addr %s225, 8
      %s227 = scalar_lea.vmem %s1, %s226
      %p228 = pneg %p57
      %p229 = pneg %p54
      %p230 = scmp.lt.s32.totalorder %s26, 1
      %s231 = scalar_select %p230, %s26, 1
      %s232 = smul.addr %s231, 3
      %s233 = smul.addr %s232, 8
      %s234 = scalar_lea.vmem %s2, %s233
      %p235 = pneg %p83
      %p236 = pneg %p80
      %p237 = scmp.lt.s32.totalorder %s26, 1
      %s238 = scalar_select %p237, %s26, 1
      %s239 = smul.addr %s238, 2
      %s240 = smul.addr %s239, 8
      %s241 = scalar_lea.vmem %s3, %s240
      %p242 = pneg %p109
      %p243 = pneg %p106
      %p244 = scmp.lt.s32.totalorder %s26, 1
      %s245 = scalar_select %p244, %s26, 1
      %s246 = smul.addr %s245, 8
      %s247 = scalar_lea.vmem %s4, %s246
      %p248 = pneg %p135
      %p249 = pneg %p132
      %p250 = pneg %p163
      %p251 = pneg %p160
      %p252 = scmp.lt.s32.totalorder %s26, 1
      %s253 = scalar_select %p252, %s26, 1
      %p254 = scmp.lt.s32.totalorder %s27, 9
      %s255 = scalar_select %p254, %s27, 9
      %s256 = smul.addr %s255, 2
      %s257 = smul.addr %s253, 20
      %s258 = sadd.s32 %s256, %s257
      %s259 = smul.addr %s258, 8
      %s260 = scalar_lea.vmem %s5, %s259
      %s261 = sld [smem:[#allocation5 + %s27]]
      %p262 = scmp.lt.s32.totalorder %s261, 7
      %s263 = scalar_select %p262, %s261, 7
      %s264 = smul.addr %s263, 10
      %s265 = smul.addr %s264, 8
      %s266 = scalar_lea.vmem %s1, %s265
      %s267 = sld [smem:[#allocation5 + %s27]]
      %p268 = scmp.lt.s32.totalorder %s26, 1
      %s269 = scalar_select %p268, %s26, 1
      %s270 = smul.addr %s269, 3
      %s271 = smul.addr %s270, 8
      %s272 = scalar_lea.vmem %s2, %s271
      %p273 = scmp.lt.s32.totalorder %s26, 1
      %s274 = scalar_select %p273, %s26, 1
      %s275 = smul.addr %s274, 2
      %s276 = smul.addr %s275, 8
      %s277 = scalar_lea.vmem %s3, %s276
      %p278 = scmp.lt.s32.totalorder %s26, 1
      %s279 = scalar_select %p278, %s26, 1
      %s280 = smul.addr %s279, 8
      %s281 = scalar_lea.vmem %s4, %s280
      %p282 = scmp.lt.s32.totalorder %s26, 1
      %s283 = scalar_select %p282, %s26, 1
      %p284 = scmp.lt.s32.totalorder %s27, 9
      %s285 = scalar_select %p284, %s27, 9
      %s286 = smul.addr %s285, 2
      %s287 = smul.addr %s283, 20
      %s288 = sadd.s32 %s286, %s287
      %s289 = smul.addr %s288, 8
      %s290 = scalar_lea.vmem %s5, %s289
      %p291 = scmp.eq.s32.totalorder %s27, 0
      // Predicated region
      $region37: #{convgru_forward_pallas.1} parent=35 // pred_check
        %p292 = pneg %p291
      $region38: #{convgru_forward_pallas.1} parent=35 // pred_check_branch
        %294 = sbr.rel (%p292) target = $region40
      $region39: #{convgru_forward_pallas.1} parent=35 // pred_region
        %295 = vst [vmem:[#allocation2] sm:$0xff] 0.0
        %296 = vst [vmem:[#allocation2 + $0x8] sm:$0xff] 0.0
        %vm297 = vcmask 277504
        %298 = vst.msk [vmem:[#allocation2 + $0x10] sm:$0xff] %vm297, 0.0
        %299 = vst [vmem:[#allocation3] sm:$0xff] 0.0
        %300 = vst [vmem:[#allocation3 + $0x8] sm:$0xff] 0.0
        %301 = vst.msk [vmem:[#allocation3 + $0x10] sm:$0xff] %vm297, 0.0
      $region40: #{convgru_forward_pallas.1} parent=35 // pred_fallthru
        _
      %v302 = vlaneseq
      %v303 = vand.u32 %v302, 127
      %v304 = vadd.s32 %v303, 128
      %vm305 = vcmp.lt.s32.totalorder %v303, 0
      %v306 = vsub.s32 0, %v303
      %v307 = vsel %vm305, %v306, %v303
      %v308 = vshrl.u32 %v307, 4
      %v309 = vand.u32 %v307, 15
      %v310 = vsub.s32 0, %v309
      %v311 = vsel %vm305, %v310, %v309
      %vm312 = vcmp.lt.s32.totalorder %v304, 0
      %v313 = vsub.s32 0, %v304
      %v314 = vsel %vm312, %v313, %v304
      %v315 = vshrl.u32 %v314, 4
      %v316 = vand.u32 %v314, 15
      %v317 = vsub.s32 0, %v316
      %v318 = vsel %vm312, %v317, %v316
      %vm319 = vcmp.ne.s32.totalorder %v311, 0
      %vm320 = vcmp.ne.s32.totalorder %v318, 0
      %vm321 = vcmp.lt.s32.totalorder %v311, 0
      %vm322 = vcmp.lt.s32.totalorder %v318, 0
      %vm323 = vmand %vm321, %vm319
      %vm324 = vmand %vm322, %vm320
      %v325 = vadd.s32 %v311, 16
      %v326 = vadd.s32 %v318, 16
      %v327 = vsel %vm323, %v325, %v311
      %v328 = vsel %vm324, %v326, %v318
      %v329 = vadd.s32 %v327, 4294967295
      %v330 = vadd.s32 %v328, 4294967295
      %vm331 = vcmp.ge.s32.totalorder %v329, 0
      %vm332 = vcmp.ge.s32.totalorder %v330, 0
      %vm333 = vcmp.lt.s32.totalorder %v329, 16
      %vm334 = vcmp.lt.s32.totalorder %v330, 16
      %vm335 = vmand %vm331, %vm333
      %vm336 = vmand %vm332, %vm334
      %v337 = vadd.s32 %v327, 1
      %v338 = vadd.s32 %v328, 1
      %vm339 = vcmp.ge.s32.totalorder %v337, 0
      %vm340 = vcmp.ge.s32.totalorder %v338, 0
      %vm341 = vcmp.lt.s32.totalorder %v337, 16
      %vm342 = vcmp.lt.s32.totalorder %v338, 16
      %vm343 = vmand %vm339, %vm341
      %vm344 = vmand %vm340, %vm342
      %v345 = vld [vmem:[%s272] sm:$0xff]
      %v346 = vld [vmem:[%s272 + $0x8] sm:$0xff]
      %v347 = vld [vmem:[%s272 + $0x10] sm:$0xff]
      %v348 = vld [vmem:[%s266] sm:$0xff]
      %v349 = vld [vmem:[%s266 + $0x8] sm:$0xff]
      %v350 = vld [vmem:[%s266 + $0x10] sm:$0xff]
      %v351 = vld [vmem:[%s266 + $0x18] sm:$0xff]
      %v352 = vld [vmem:[%s266 + $0x20] sm:$0xff]
      %v353 = vld [vmem:[%s266 + $0x28] sm:$0xff]
      %v354 = vld [vmem:[%s266 + $0x30] sm:$0xff]
      %v355 = vld [vmem:[%s266 + $0x38] sm:$0xff]
      %v356 = vld [vmem:[%s266 + $0x40] sm:$0x1f]
      %v357 = vld [vmem:[%s266 + $0x48] sm:$0x1f]
      %vm358 = vcmask 302080
      %v360 = vsel %vm358, %v345, 0
      %v363 = vsel %vm358, %v346, 0
      %v366 = vsel %vm358, %v347, 0
      %vm368 = vcmask 1044480
      %v370 = vsel %vm368, %v356, 0
      %v373 = vsel %vm368, %v357, 0
      %375 = vmatprep.subr.mxu0 0.0
      %376 = vmatpush1.msra.mxu0 0.0
      %377 = vmatprep.subr.mxu0 0.0
      %378 = vmatpush1.msra.mxu0 0.0
      %379 = vmatprep.subr.mxu0 0.0
      %380 = vmatpush1.msra.mxu0 0.0
      %381 = vmatprep.subr.mxu0 0.0
      %382 = vmatpush1.msra.mxu0 0.0
      %383 = vmatprep.subr.mxu0 0.0
      %384 = vmatpush1.msra.mxu0 0.0
      %385 = vmatprep.subr.mxu0 0.0
      %386 = vmatpush1.msra.mxu0 0.0
      %387 = vmatprep.subr.mxu0 0.0
      %388 = vmatpush1.msra.mxu0 0.0
      %389 = vmatprep.subr.mxu0 0.0
      %390 = vmatpush1.msra.mxu0 0.0
      %391 = vmatprep.subr.mxu0 0.0
      %392 = vmatpush1.msra.mxu0 0.0
      %393 = vmatprep.subr.mxu0 0.0
      %394 = vmatpush1.msra.mxu0 0.0
      %395 = vmatprep.subr.mxu0 0.0
      %396 = vmatpush1.msra.mxu0 0.0
      %397 = vmatprep.subr.mxu0 %v373
      %398 = vmatpush1.msra.mxu0 %v370
      %399 = vmatprep.subr.mxu0 %v355
      %400 = vmatpush1.msra.mxu0 %v354
      %401 = vmatprep.subr.mxu0 %v353
      %402 = vmatpush1.msra.mxu0 %v352
      %403 = vmatprep.subr.mxu0 %v351
      %404 = vmatpush1.msra.mxu0 %v350
      %405 = vmatprep.subr.mxu0 %v349
      %406 = vmatpush1.msra.mxu0 %v348
      %407 = vmatprep.subr.mxu0 0.0
      %408 = vmatpush2.msra.mxu0 0.0
      %409 = vmatprep.subr.mxu0 0.0
      %410 = vmatpush2.msra.mxu0 0.0
      %411 = vmatprep.subr.mxu0 0.0
      %412 = vmatpush2.msra.mxu0 0.0
      %413 = vmatprep.subr.mxu0 0.0
      %414 = vmatpush2.msra.mxu0 0.0
      %415 = vmatprep.subr.mxu0 0.0
      %416 = vmatpush2.msra.mxu0 0.0
      %417 = vmatprep.subr.mxu0 0.0
      %418 = vmatpush2.msra.mxu0 0.0
      %419 = vmatprep.subr.mxu0 0.0
      %420 = vmatpush2.msra.mxu0 0.0
      %421 = vmatprep.subr.mxu0 0.0
      %422 = vmatpush2.msra.mxu0 0.0
      %423 = vmatprep.subr.mxu0 0.0
      %424 = vmatpush2.msra.mxu0 0.0
      %425 = vmatprep.subr.mxu0 0.0
      %426 = vmatpush2.msra.mxu0 0.0
      %427 = vmatprep.subr.mxu0 0.0
      %428 = vmatpush2.msra.mxu0 0.0
      %429 = vmatprep.subr.mxu0 0.0
      %430 = vmatpush2.msra.mxu0 0.0
      %431 = vmatprep.subr.mxu0 0.0
      %432 = vmatpush2.msra.mxu0 0.0
      %433 = vmatprep.subr.mxu0 0.0
      %434 = vmatpush2.msra.mxu0 0.0
      %435 = vmatprep.subr.mxu0 0.0
      %436 = vmatpush2.msra.mxu0 0.0
      %437 = vmatprep.subr.mxu0 0.0
      %438 = vmatpush2.msra.mxu0 0.0
      %439 = vmatprep.mubr.f32.mxu0 0.0
      %440 = vmatmul.mubr.f32.gmra.mxu0 %v360
      %v441 = vpop.f32.mrf.mxu0
      %v442 = vadd.f32 0.0, %v441
      %v443 = vpop.f32.mrf.mxu0
      %v444 = vadd.f32 0.0, %v443
      %445 = vmatprep.mubr.f32.mxu0 0.0
      %446 = vmatmul.mubr.f32.gmra.mxu0 %v363
      %v447 = vpop.f32.mrf.mxu0
      %v448 = vadd.f32 0.0, %v447
      %v449 = vpop.f32.mrf.mxu0
      %v450 = vadd.f32 0.0, %v449
      %451 = vmatprep.mubr.f32.mxu0 0.0
      %452 = vmatmul.mubr.f32.gmra.mxu0 %v366
      %v453 = vpop.f32.mrf.mxu0
      %v454 = vadd.f32 0.0, %v453
      %v455 = vpop.f32.mrf.mxu0
      %v456 = vadd.f32 0.0, %v455
      %457 = vdwg.mxu0
      %v458 = vld [vmem:[#allocation2] sm:$0xff]
      %v459 = vld [vmem:[#allocation2 + $0x8] sm:$0xff]
      %v460 = vsel %vm335, 1, 0
      %v461 = vsel %vm336, 1, 0
      %vm462 = vcmp.eq.s32.totalorder %v460, 1
      %vm463 = vcmp.eq.s32.totalorder %v461, 1
      %v464 = vsel %vm462, %v458, 0.0
      %v465 = vsel %vm463, %v459, 0.0
      %v466 = vld [vmem:[#allocation2 + $0x10] sm:$0xff]
      %v467 = vsel %vm343, 1, 0
      %v468 = vsel %vm344, 1, 0
      %vm469 = vcmp.eq.s32.totalorder %v467, 1
      %vm470 = vcmp.eq.s32.totalorder %v468, 1
      %474 = vrot.lane.b32.xlu0 %v458, 126
      %v475 = vpop.permute.xlu0 %474
      %476 = vrot.lane.b32.xlu0 %v459, 126
      %v477 = vpop.permute.xlu0 %476
      %478 = vrot.lane.b32.xlu0 %v466, 126
      %v479 = vpop.permute.xlu0 %478
      %vm480 = vcmask 1031168
      %v481 = vsel %vm480, %v475, %v477
      %v482 = vsel %vm480, %v477, %v479
      %v485 = vsel %vm469, %v481, 0.0
      %v486 = vsel %vm470, %v482, 0.0
      %487 = vrot.lane.b32.xlu0 %v458, 112
      %v488 = vpop.permute.xlu0 %487
      %489 = vrot.lane.b32.xlu0 %v459, 112
      %v490 = vpop.permute.xlu0 %489
      %491 = vrot.lane.b32.xlu0 %v466, 112
      %v492 = vpop.permute.xlu0 %491
      %vm493 = vcmask 916480
      %v494 = vsel %vm493, %v488, %v490
      %v495 = vsel %vm493, %v490, %v492
      %v498 = vsel %vm462, %v494, 0.0
      %v499 = vsel %vm463, %v495, 0.0
      %500 = vrot.lane.b32.xlu0 %v458, 110
      %v501 = vpop.permute.xlu0 %500
      %502 = vrot.lane.b32.xlu0 %v459, 110
      %v503 = vpop.permute.xlu0 %502
      %504 = vrot.lane.b32.xlu0 %v466, 110
      %v505 = vpop.permute.xlu0 %504
      %vm506 = vcmask 900096
      %v507 = vsel %vm506, %v501, %v503
      %v508 = vsel %vm506, %v503, %v505
      %v511 = vsel %vm469, %v507, 0.0
      %v512 = vsel %vm470, %v508, 0.0
      %513 = vrot.lane.b32.xlu0 %v458, 96
      %v514 = vpop.permute.xlu0 %513
      %515 = vrot.lane.b32.xlu0 %v459, 96
      %v516 = vpop.permute.xlu0 %515
      %517 = vrot.lane.b32.xlu0 %v466, 96
      %v518 = vpop.permute.xlu0 %517
      %vm519 = vcmask 785408
      %v520 = vsel %vm519, %v514, %v516
      %v521 = vsel %vm519, %v516, %v518
      %v524 = vsel %vm462, %v520, 0.0
      %v525 = vsel %vm463, %v521, 0.0
      %526 = vrot.lane.b32.xlu0 %v458, 94
      %v527 = vpop.permute.xlu0 %526
      %528 = vrot.lane.b32.xlu0 %v459, 94
      %v529 = vpop.permute.xlu0 %528
      %530 = vrot.lane.b32.xlu0 %v466, 94
      %v531 = vpop.permute.xlu0 %530
      %vm532 = vcmask 769024
      %v533 = vsel %vm532, %v527, %v529
      %v534 = vsel %vm532, %v529, %v531
      %v537 = vsel %vm469, %v533, 0.0
      %v538 = vsel %vm470, %v534, 0.0
      %539 = vrot.lane.b32.xlu0 %v458, 127
      %v540 = vpop.permute.xlu0 %539
      %541 = vrot.lane.b32.xlu0 %v459, 127
      %v542 = vpop.permute.xlu0 %541
      %543 = vrot.lane.b32.xlu0 %v466, 127
      %v544 = vpop.permute.xlu0 %543
      %vm545 = vcmask 1039360
      %v546 = vsel %vm545, %v540, %v542
      %v547 = vsel %vm545, %v542, %v544
      %550 = vrot.lane.b32.xlu0 %v458, 111
      %v551 = vpop.permute.xlu0 %550
      %552 = vrot.lane.b32.xlu0 %v459, 111
      %v553 = vpop.permute.xlu0 %552
      %554 = vrot.lane.b32.xlu0 %v466, 111
      %v555 = vpop.permute.xlu0 %554
      %vm556 = vcmask 908288
      %v557 = vsel %vm556, %v551, %v553
      %v558 = vsel %vm556, %v553, %v555
      %561 = vrot.lane.b32.xlu0 %v458, 95
      %v562 = vpop.permute.xlu0 %561
      %563 = vrot.lane.b32.xlu0 %v459, 95
      %v564 = vpop.permute.xlu0 %563
      %565 = vrot.lane.b32.xlu0 %v466, 95
      %v566 = vpop.permute.xlu0 %565
      %vm567 = vcmask 777216
      %v568 = vsel %vm567, %v562, %v564
      %v569 = vsel %vm567, %v564, %v566
      %v572 = vld [vmem:[%s277] sm:$0xff]
      %v573 = vld [vmem:[%s277 + $0x8] sm:$0xff]
      %vm574 = vcmask 588800
      %v576 = vsel %vm574, %v572, 0
      %v579 = vsel %vm574, %v573, 0
      %581 = vmatprep.subr.mxu0 0.0
      %582 = vmatpush1.msra.mxu0 0.0
      %583 = vmatprep.subr.mxu0 0.0
      %584 = vmatpush1.msra.mxu0 0.0
      %585 = vmatprep.subr.mxu0 0.0
      %586 = vmatpush1.msra.mxu0 0.0
      %587 = vmatprep.subr.mxu0 0.0
      %588 = vmatpush1.msra.mxu0 0.0
      %589 = vmatprep.subr.mxu0 0.0
      %590 = vmatpush1.msra.mxu0 0.0
      %591 = vmatprep.subr.mxu0 0.0
      %592 = vmatpush1.msra.mxu0 0.0
      %593 = vmatprep.subr.mxu0 0.0
      %594 = vmatpush1.msra.mxu0 0.0
      %595 = vmatprep.subr.mxu0 %v538
      %596 = vmatpush1.msra.mxu0 %v537
      %597 = vmatprep.subr.mxu0 %v569
      %598 = vmatpush1.msra.mxu0 %v568
      %599 = vmatprep.subr.mxu0 %v525
      %600 = vmatpush1.msra.mxu0 %v524
      %601 = vmatprep.subr.mxu0 %v512
      %602 = vmatpush1.msra.mxu0 %v511
      %603 = vmatprep.subr.mxu0 %v558
      %604 = vmatpush1.msra.mxu0 %v557
      %605 = vmatprep.subr.mxu0 %v499
      %606 = vmatpush1.msra.mxu0 %v498
      %607 = vmatprep.subr.mxu0 %v486
      %608 = vmatpush1.msra.mxu0 %v485
      %609 = vmatprep.subr.mxu0 %v547
      %610 = vmatpush1.msra.mxu0 %v546
      %611 = vmatprep.subr.mxu0 %v465
      %612 = vmatpush1.msra.mxu0 %v464
      %613 = vmatprep.subr.mxu0 0.0
      %614 = vmatpush2.msra.mxu0 0.0
      %615 = vmatprep.subr.mxu0 0.0
      %616 = vmatpush2.msra.mxu0 0.0
      %617 = vmatprep.subr.mxu0 0.0
      %618 = vmatpush2.msra.mxu0 0.0
      %619 = vmatprep.subr.mxu0 0.0
      %620 = vmatpush2.msra.mxu0 0.0
      %621 = vmatprep.subr.mxu0 0.0
      %622 = vmatpush2.msra.mxu0 0.0
      %623 = vmatprep.subr.mxu0 0.0
      %624 = vmatpush2.msra.mxu0 0.0
      %625 = vmatprep.subr.mxu0 0.0
      %626 = vmatpush2.msra.mxu0 0.0
      %627 = vmatprep.subr.mxu0 0.0
      %628 = vmatpush2.msra.mxu0 0.0
      %629 = vmatprep.subr.mxu0 0.0
      %630 = vmatpush2.msra.mxu0 0.0
      %631 = vmatprep.subr.mxu0 0.0
      %632 = vmatpush2.msra.mxu0 0.0
      %633 = vmatprep.subr.mxu0 0.0
      %634 = vmatpush2.msra.mxu0 0.0
      %635 = vmatprep.subr.mxu0 0.0
      %636 = vmatpush2.msra.mxu0 0.0
      %637 = vmatprep.subr.mxu0 0.0
      %638 = vmatpush2.msra.mxu0 0.0
      %639 = vmatprep.subr.mxu0 0.0
      %640 = vmatpush2.msra.mxu0 0.0
      %641 = vmatprep.subr.mxu0 0.0
      %642 = vmatpush2.msra.mxu0 0.0
      %643 = vmatprep.subr.mxu0 0.0
      %644 = vmatpush2.msra.mxu0 0.0
      %645 = vmatprep.mubr.f32.mxu0 0.0
      %646 = vmatmul.mubr.f32.gmra.mxu0 %v576
      %v647 = vpop.f32.mrf.mxu0
      %v648 = vadd.f32 0.0, %v647
      %v649 = vpop.f32.mrf.mxu0
      %v650 = vadd.f32 0.0, %v649
      %651 = vmatprep.mubr.f32.mxu0 0.0
      %652 = vmatmul.mubr.f32.gmra.mxu0 %v579
      %v653 = vpop.f32.mrf.mxu0
      %v654 = vadd.f32 0.0, %v653
      %v655 = vpop.f32.mrf.mxu0
      %v656 = vadd.f32 0.0, %v655
      %657 = vdwg.mxu0
      %v658 = vadd.f32 %v442, %v648
      %v659 = vadd.f32 %v444, %v650
      %v660 = vxor.u32 %v658, 2147483648
      %v661 = vxor.u32 %v659, 2147483648
      %v662 = vmul.f32 %v660, 1.442695
      %v663 = vpow.pop %v662
      %v664 = vmul.f32 %v661, 1.442695
      %v665 = vpow.pop %v664
      %v666 = vadd.f32 %v663, 1.0
      %v667 = vadd.f32 %v665, 1.0
      %v668 = vrcp.pop %v666
      %v669 = vmul.f32 1.0, %v668
      %v670 = vrcp.pop %v667
      %v671 = vmul.f32 1.0, %v670
      %v672 = vadd.f32 %v448, %v654
      %v673 = vadd.f32 %v450, %v656
      %v674 = vxor.u32 %v672, 2147483648
      %v675 = vxor.u32 %v673, 2147483648
      %v676 = vmul.f32 %v674, 1.442695
      %v677 = vpow.pop %v676
      %v678 = vmul.f32 %v675, 1.442695
      %v679 = vpow.pop %v678
      %v680 = vadd.f32 %v677, 1.0
      %v681 = vadd.f32 %v679, 1.0
      %v682 = vrcp.pop %v680
      %v683 = vmul.f32 1.0, %v682
      %v684 = vrcp.pop %v681
      %v685 = vmul.f32 1.0, %v684
      %688 = vrot.lane.b32.xlu0 %v683, 17
      %v689 = vpop.permute.xlu0 %688
      %690 = vrot.lane.b32.xlu0 %v685, 17
      %v691 = vpop.permute.xlu0 %690
      %vm692 = vcmask 138240
      %v693 = vsel %vm692, %v689, %v691
      %v697 = vmul.f32 %v458, %v689
      %v698 = vmul.f32 %v459, %v693
      %v699 = vmul.f32 %v466, %v691
      %vm700 = vcmask 1047688
      %701 = vst.msk [vmem:[#allocation3] sm:$0xff] %vm700, %v697
      %702 = vst [vmem:[#allocation3 + $0x8] sm:$0xff] %v698
      %703 = vst.msk [vmem:[#allocation3 + $0x10] sm:$0xff] %vm692, %v699
      %v704 = vld [vmem:[#allocation3] sm:$0xff]
      %v705 = vld [vmem:[#allocation3 + $0x8] sm:$0xff]
      %v706 = vsel %vm462, %v704, 0.0
      %v707 = vsel %vm463, %v705, 0.0
      %v708 = vld [vmem:[#allocation3 + $0x10] sm:$0xff]
      %712 = vrot.lane.b32.xlu0 %v704, 126
      %v713 = vpop.permute.xlu0 %712
      %714 = vrot.lane.b32.xlu0 %v705, 126
      %v715 = vpop.permute.xlu0 %714
      %716 = vrot.lane.b32.xlu0 %v708, 126
      %v717 = vpop.permute.xlu0 %716
      %v718 = vsel %vm480, %v713, %v715
      %v719 = vsel %vm480, %v715, %v717
      %v722 = vsel %vm469, %v718, 0.0
      %v723 = vsel %vm470, %v719, 0.0
      %724 = vrot.lane.b32.xlu0 %v704, 112
      %v725 = vpop.permute.xlu0 %724
      %726 = vrot.lane.b32.xlu0 %v705, 112
      %v727 = vpop.permute.xlu0 %726
      %728 = vrot.lane.b32.xlu0 %v708, 112
      %v729 = vpop.permute.xlu0 %728
      %v730 = vsel %vm493, %v725, %v727
      %v731 = vsel %vm493, %v727, %v729
      %v734 = vsel %vm462, %v730, 0.0
      %v735 = vsel %vm463, %v731, 0.0
      %736 = vrot.lane.b32.xlu0 %v704, 110
      %v737 = vpop.permute.xlu0 %736
      %738 = vrot.lane.b32.xlu0 %v705, 110
      %v739 = vpop.permute.xlu0 %738
      %740 = vrot.lane.b32.xlu0 %v708, 110
      %v741 = vpop.permute.xlu0 %740
      %v742 = vsel %vm506, %v737, %v739
      %v743 = vsel %vm506, %v739, %v741
      %v746 = vsel %vm469, %v742, 0.0
      %v747 = vsel %vm470, %v743, 0.0
      %748 = vrot.lane.b32.xlu0 %v704, 96
      %v749 = vpop.permute.xlu0 %748
      %750 = vrot.lane.b32.xlu0 %v705, 96
      %v751 = vpop.permute.xlu0 %750
      %752 = vrot.lane.b32.xlu0 %v708, 96
      %v753 = vpop.permute.xlu0 %752
      %v754 = vsel %vm519, %v749, %v751
      %v755 = vsel %vm519, %v751, %v753
      %v758 = vsel %vm462, %v754, 0.0
      %v759 = vsel %vm463, %v755, 0.0
      %760 = vrot.lane.b32.xlu0 %v704, 94
      %v761 = vpop.permute.xlu0 %760
      %762 = vrot.lane.b32.xlu0 %v705, 94
      %v763 = vpop.permute.xlu0 %762
      %764 = vrot.lane.b32.xlu0 %v708, 94
      %v765 = vpop.permute.xlu0 %764
      %v766 = vsel %vm532, %v761, %v763
      %v767 = vsel %vm532, %v763, %v765
      %v770 = vsel %vm469, %v766, 0.0
      %v771 = vsel %vm470, %v767, 0.0
      %772 = vrot.lane.b32.xlu0 %v704, 127
      %v773 = vpop.permute.xlu0 %772
      %774 = vrot.lane.b32.xlu0 %v705, 127
      %v775 = vpop.permute.xlu0 %774
      %776 = vrot.lane.b32.xlu0 %v708, 127
      %v777 = vpop.permute.xlu0 %776
      %v778 = vsel %vm545, %v773, %v775
      %v779 = vsel %vm545, %v775, %v777
      %782 = vrot.lane.b32.xlu0 %v704, 111
      %v783 = vpop.permute.xlu0 %782
      %784 = vrot.lane.b32.xlu0 %v705, 111
      %v785 = vpop.permute.xlu0 %784
      %786 = vrot.lane.b32.xlu0 %v708, 111
      %v787 = vpop.permute.xlu0 %786
      %v788 = vsel %vm556, %v783, %v785
      %v789 = vsel %vm556, %v785, %v787
      %792 = vrot.lane.b32.xlu0 %v704, 95
      %v793 = vpop.permute.xlu0 %792
      %794 = vrot.lane.b32.xlu0 %v705, 95
      %v795 = vpop.permute.xlu0 %794
      %796 = vrot.lane.b32.xlu0 %v708, 95
      %v797 = vpop.permute.xlu0 %796
      %v798 = vsel %vm567, %v793, %v795
      %v799 = vsel %vm567, %v795, %v797
      %v802 = vld [vmem:[%s281] sm:$0xff]
      %v804 = vsel %vm574, %v802, 0
      %806 = vmatprep.subr.mxu0 0.0
      %807 = vmatpush1.msra.mxu0 0.0
      %808 = vmatprep.subr.mxu0 0.0
      %809 = vmatpush1.msra.mxu0 0.0
      %810 = vmatprep.subr.mxu0 0.0
      %811 = vmatpush1.msra.mxu0 0.0
      %812 = vmatprep.subr.mxu0 0.0
      %813 = vmatpush1.msra.mxu0 0.0
      %814 = vmatprep.subr.mxu0 0.0
      %815 = vmatpush1.msra.mxu0 0.0
      %816 = vmatprep.subr.mxu0 0.0
      %817 = vmatpush1.msra.mxu0 0.0
      %818 = vmatprep.subr.mxu0 0.0
      %819 = vmatpush1.msra.mxu0 0.0
      %820 = vmatprep.subr.mxu0 %v771
      %821 = vmatpush1.msra.mxu0 %v770
      %822 = vmatprep.subr.mxu0 %v799
      %823 = vmatpush1.msra.mxu0 %v798
      %824 = vmatprep.subr.mxu0 %v759
      %825 = vmatpush1.msra.mxu0 %v758
      %826 = vmatprep.subr.mxu0 %v747
      %827 = vmatpush1.msra.mxu0 %v746
      %828 = vmatprep.subr.mxu0 %v789
      %829 = vmatpush1.msra.mxu0 %v788
      %830 = vmatprep.subr.mxu0 %v735
      %831 = vmatpush1.msra.mxu0 %v734
      %832 = vmatprep.subr.mxu0 %v723
      %833 = vmatpush1.msra.mxu0 %v722
      %834 = vmatprep.subr.mxu0 %v779
      %835 = vmatpush1.msra.mxu0 %v778
      %836 = vmatprep.subr.mxu0 %v707
      %837 = vmatpush1.msra.mxu0 %v706
      %838 = vmatprep.subr.mxu0 0.0
      %839 = vmatpush2.msra.mxu0 0.0
      %840 = vmatprep.subr.mxu0 0.0
      %841 = vmatpush2.msra.mxu0 0.0
      %842 = vmatprep.subr.mxu0 0.0
      %843 = vmatpush2.msra.mxu0 0.0
      %844 = vmatprep.subr.mxu0 0.0
      %845 = vmatpush2.msra.mxu0 0.0
      %846 = vmatprep.subr.mxu0 0.0
      %847 = vmatpush2.msra.mxu0 0.0
      %848 = vmatprep.subr.mxu0 0.0
      %849 = vmatpush2.msra.mxu0 0.0
      %850 = vmatprep.subr.mxu0 0.0
      %851 = vmatpush2.msra.mxu0 0.0
      %852 = vmatprep.subr.mxu0 0.0
      %853 = vmatpush2.msra.mxu0 0.0
      %854 = vmatprep.subr.mxu0 0.0
      %855 = vmatpush2.msra.mxu0 0.0
      %856 = vmatprep.subr.mxu0 0.0
      %857 = vmatpush2.msra.mxu0 0.0
      %858 = vmatprep.subr.mxu0 0.0
      %859 = vmatpush2.msra.mxu0 0.0
      %860 = vmatprep.subr.mxu0 0.0
      %861 = vmatpush2.msra.mxu0 0.0
      %862 = vmatprep.subr.mxu0 0.0
      %863 = vmatpush2.msra.mxu0 0.0
      %864 = vmatprep.subr.mxu0 0.0
      %865 = vmatpush2.msra.mxu0 0.0
      %866 = vmatprep.subr.mxu0 0.0
      %867 = vmatpush2.msra.mxu0 0.0
      %868 = vmatprep.subr.mxu0 0.0
      %869 = vmatpush2.msra.mxu0 0.0
      %870 = vmatprep.mubr.f32.mxu0 0.0
      %871 = vmatmul.mubr.f32.gmra.mxu0 %v804
      %v872 = vpop.f32.mrf.mxu0
      %v873 = vadd.f32 0.0, %v872
      %v874 = vpop.f32.mrf.mxu0
      %v875 = vadd.f32 0.0, %v874
      %876 = vdwg.mxu0
      %v877 = vadd.f32 %v454, %v873
      %v878 = vadd.f32 %v456, %v875
      %v879 = vtanh.pop %v877
      %v880 = vtanh.pop %v878
      %v881 = vsub.f32 1.0, %v669
      %v882 = vsub.f32 1.0, %v671
      %885 = vrot.lane.b32.xlu0 %v881, 17
      %v886 = vpop.permute.xlu0 %885
      %887 = vrot.lane.b32.xlu0 %v882, 17
      %v888 = vpop.permute.xlu0 %887
      %v889 = vsel %vm692, %v886, %v888
      %v893 = vmul.f32 %v458, %v886
      %v894 = vmul.f32 %v459, %v889
      %v895 = vmul.f32 %v466, %v888
      %v896 = vmul.f32 %v879, %v669
      %v897 = vmul.f32 %v880, %v671
      %900 = vrot.lane.b32.xlu0 %v896, 17
      %v901 = vpop.permute.xlu0 %900
      %902 = vrot.lane.b32.xlu0 %v897, 17
      %v903 = vpop.permute.xlu0 %902
      %v904 = vsel %vm692, %v901, %v903
      %v908 = vadd.f32 %v893, %v901
      %v909 = vadd.f32 %v894, %v904
      %v910 = vadd.f32 %v895, %v903
      %911 = vst.msk [vmem:[#allocation2] sm:$0xff] %vm700, %v908
      %912 = vst [vmem:[#allocation2 + $0x8] sm:$0xff] %v909
      %913 = vst.msk [vmem:[#allocation2 + $0x10] sm:$0xff] %vm692, %v910
      %917 = vrot.lane.b32.xlu0 %v908, 111
      %v918 = vpop.permute.xlu0 %917
      %919 = vrot.lane.b32.xlu0 %v909, 111
      %v920 = vpop.permute.xlu0 %919
      %921 = vrot.lane.b32.xlu0 %v910, 111
      %v922 = vpop.permute.xlu0 %921
      %v923 = vsel %vm556, %v918, %v920
      %v924 = vsel %vm556, %v920, %v922
      %927 = vst [vmem:[%s290] sm:$0xff] %v923
      %928 = vst [vmem:[%s290 + $0x8] sm:$0xff] %v924
      %p929 = scmp.lt.s32.totalorder %s26, 1
      %s930 = scalar_select %p929, %s26, 1
      %p931 = scmp.lt.s32.totalorder %s27, 9
      %s932 = scalar_select %p931, %s27, 9
      %s933 = smul.addr %s932, 2
      %s934 = smul.addr %s930, 20
      %s935 = sadd.s32 %s933, %s934
      %s936 = smul.addr %s935, 8
      %s937 = scalar_lea.vmem %s5, %s936
      // Predicated region
      $region41: #{convgru_forward_pallas.1} parent=35 // pred_check
        %p938 = pneg %p160
      $region42: #{convgru_forward_pallas.1} parent=35 // pred_check_branch
        %940 = sbr.rel (%p938) target = $region44
      $region43: #{convgru_forward_pallas.1} parent=35 // pred_region
        _
      $region44: #{convgru_forward_pallas.1} parent=35 // pred_fallthru
        _
    $region36: #{convgru_forward_pallas.1} parent=5 // pred_fallthru
      _
    %p941 = scmp.le.s32.totalorder 2, %s17
    // Predicated region
    $region45: #{convgru_forward_pallas.1} parent=5 // pred_check
      %p942 = pneg %p941
    $region46: #{convgru_forward_pallas.1} parent=5 // pred_check_branch
      %944 = sbr.rel (%p942) target = $region48
    $region47: #{convgru_forward_pallas.1} parent=5 // pred_region
      %s945 = ssub.s32 %s17, 2
      // Predicated region
      $region49: #{convgru_forward_pallas.1} parent=47 // pred_check
        %p946 = pneg %p166
      $region50: #{convgru_forward_pallas.1} parent=47 // pred_check_branch
        %948 = sbr.rel (%p946) target = $region52
      $region51: #{convgru_forward_pallas.1} parent=47 // pred_region
        %p949 = scmp.lt.s32.totalorder %s28, 1
        %s950 = scalar_select %p949, %s28, 1
        %p951 = scmp.lt.s32.totalorder %s29, 9
        %s952 = scalar_select %p951, %s29, 9
        %s953 = smul.addr %s952, 2
        %s954 = smul.addr %s950, 20
        %s955 = sadd.s32 %s953, %s954
        %s956 = smul.addr %s955, 8
        %s957 = scalar_lea.vmem %s5, %s956
      $region52: #{convgru_forward_pallas.1} parent=47 // pred_fallthru
        _
    $region48: #{convgru_forward_pallas.1} parent=5 // pred_fallthru
      _
  $region6: #{convgru_forward_pallas.1} parent=0 // loop_footer
    %s21 = sadd.s32 1, %s17
  $region7: #{convgru_forward_pallas.1} parent=0 // loop_footer_branch
    %16 = sbr.rel target = $region3
  $region8: #{convgru_forward_pallas.1} parent=0 // loop_exit
    _

</llo_original>
